<compile_context>
chip_gen: v5e
topology: v5e:2x2
jax: 0.10.0
libtpu: 0.0.40
codegen_flags: <defaults>
</compile_context>

<pallas_src>
import functools

import jax
import jax.numpy as jnp
from jax.experimental import pallas as pl
from jax.experimental.pallas import tpu as pltpu


# ----------------------------- kernel helpers ------------------------------ #

def _layer_norm(v, g, b, eps=1e-5):
    mu = jnp.mean(v, axis=-1, keepdims=True)
    var = jnp.mean((v - mu) ** 2, axis=-1, keepdims=True)
    return (v - mu) * jax.lax.rsqrt(var + eps) * g + b


# ----------------------------- fused encoder kernel ------------------------ #

def _encoder_kernel(num_heads,
                    x_ref, maskb_ref,
                    wqkv_ref, bqkv_ref, wo_ref, bo_ref,
                    g1_ref, be1_ref,
                    w1_ref, bf1_ref, w2_ref, bf2_ref,
                    g2_ref, be2_ref,
                    gf_ref, bfin_ref,
                    o_ref):
    """Grid = (batch_block, layer).  One grid step = one encoder layer applied
    to a (TB, S, D) batch block.  The output block is resident in VMEM across
    the layer axis and doubles as the activation carrier (no scratch)."""
    l = pl.program_id(1)
    last = pl.num_programs(1) - 1

    TB, S, D = x_ref.shape
    H = num_heads
    hd = D // H
    M = TB * S

    # Load input into the resident output block at the first layer.
    @pl.when(l == 0)
    def _():
        o_ref[...] = x_ref[...]

    x = o_ref[...].astype(jnp.float32).reshape(M, D)

    # --- fused QKV projection (1/sqrt(hd) folded into Wq/bq), bf16 MXU inputs ---
    qkv = jnp.dot(x.astype(jnp.bfloat16), wqkv_ref[0],
                  preferred_element_type=jnp.float32) + bqkv_ref[0]   # (M, 3D) f32

    bias = maskb_ref[...]                         # (TB, 1, S) additive key-mask bias

    # Per-head attention, batched over the TB batch block (single leading batch
    # dim in each einsum — same pattern as the reference flash kernel).
    # TODO(synk): pad head_dim and batch heads into one contraction for
    #   production sizes; hd=8 contractions can never be MXU-bound.
    ctxs = []
    for h in range(H):
        qh = qkv[:, 0 * D + h * hd:0 * D + (h + 1) * hd].reshape(TB, S, hd)
        kh = qkv[:, 1 * D + h * hd:1 * D + (h + 1) * hd].reshape(TB, S, hd)
        vh = qkv[:, 2 * D + h * hd:2 * D + (h + 1) * hd].reshape(TB, S, hd)
        s = jnp.einsum('bqd,bkd->bqk',
                       qh.astype(jnp.bfloat16), kh.astype(jnp.bfloat16),
                       preferred_element_type=jnp.float32)            # (TB, S, S)
        s = s + bias                                                  # broadcast over q
        s = s - jnp.max(s, axis=-1, keepdims=True)
        p = jnp.exp(s)
        p = p * pl.reciprocal(jnp.sum(p, axis=-1, keepdims=True), approx=True)
        ctxs.append(jnp.einsum('bqk,bkd->bqd',
                               p.astype(jnp.bfloat16), vh.astype(jnp.bfloat16),
                               preferred_element_type=jnp.float32))   # (TB, S, hd)
    ctx = jnp.concatenate(ctxs, axis=-1).reshape(M, D)

    attn = jnp.dot(ctx.astype(jnp.bfloat16), wo_ref[0],
                   preferred_element_type=jnp.float32) + bo_ref[0]

    # --- residual + LayerNorm 1 (dropout = identity, eval mode) ---
    y = _layer_norm(x + attn, g1_ref[0], be1_ref[0])

    # --- position-wise feed-forward ---
    ff = jnp.dot(y.astype(jnp.bfloat16), w1_ref[0],
                 preferred_element_type=jnp.float32) + bf1_ref[0]
    ff = jnp.maximum(ff, 0.0)
    ff = jnp.dot(ff.astype(jnp.bfloat16), w2_ref[0],
                 preferred_element_type=jnp.float32) + bf2_ref[0]

    # --- residual + LayerNorm 2 ---
    out = _layer_norm(y + ff, g2_ref[0], be2_ref[0])

    @pl.when(l != last)
    def _():
        o_ref[...] = out.reshape(TB, S, D).astype(o_ref.dtype)

    # Final LayerNorm applied in place at the last layer; the resident output
    # block is DMA'd back to HBM once per batch block.
    @pl.when(l == last)
    def _():
        o_ref[...] = _layer_norm(out, gf_ref[...], bfin_ref[...]
                                 ).reshape(TB, S, D).astype(o_ref.dtype)


# ----------------------------- param preparation ---------------------------- #

def prepare_encoder_params(params, num_heads):
    """One-time weight fusion / stacking (NOT in the per-call forward path).
    Weights are stored bf16 (MXU inputs); biases / LayerNorm params stay f32."""
    layers = params["layers"]
    D = layers[0]["wq"].shape[0]
    hd = D // num_heads
    scale = 1.0 / jnp.sqrt(jnp.float32(hd))

    wqkv = jnp.stack([jnp.concatenate([lp["wq"] * scale, lp["wk"], lp["wv"]], axis=1)
                      for lp in layers]).astype(jnp.bfloat16)            # (L, D, 3D)
    bqkv = jnp.stack([jnp.concatenate([lp["bq"] * scale, lp["bk"], lp["bv"]], axis=1)
                      for lp in layers])                                  # (L, 1, 3D)
    fused = dict(
        wqkv=wqkv, bqkv=bqkv,
        wo=jnp.stack([lp["wo"] for lp in layers]).astype(jnp.bfloat16),   # (L, D, D)
        bo=jnp.stack([lp["bo"] for lp in layers]),
        g1=jnp.stack([lp["g1"] for lp in layers]),
        be1=jnp.stack([lp["be1"] for lp in layers]),
        w1=jnp.stack([lp["w1"] for lp in layers]).astype(jnp.bfloat16),   # (L, D, d_ff)
        bf1=jnp.stack([lp["bf1"] for lp in layers]),
        w2=jnp.stack([lp["w2"] for lp in layers]).astype(jnp.bfloat16),   # (L, d_ff, D)
        bf2=jnp.stack([lp["bf2"] for lp in layers]),
        g2=jnp.stack([lp["g2"] for lp in layers]),
        be2=jnp.stack([lp["be2"] for lp in layers]),
        norm_g=params["norm_g"], norm_b=params["norm_b"],
    )
    fused["num_layers"] = len(layers)
    fused["d_model"] = D
    fused["d_ff"] = fused["w1"].shape[-1]
    return fused


# ----------------------------- forward wrapper ------------------------------ #

def encoder_forward(x, mask, fused, num_heads, tb=None):
    """x: (B, S, D) float32, mask: (B, S) with 1 = attend, 0 = masked.
    `fused` comes from prepare_encoder_params()."""
    B, S, D = x.shape
    L = fused["num_layers"]
    d_ff = fused["d_ff"]
    assert D == fused["d_model"]
    if tb is None:
        # Demo default: one batch block (fills matmul M = TB*S).
        # For v7x megacore on larger B, pick tb so that B // tb >= 2.
        tb = B
    assert B % tb == 0

    # additive key-mask bias (computed once per call, O(B*S)):
    # 0 where keep, -1e9 where masked.
    maskb = (1.0 - mask.astype(jnp.float32)).reshape(B, 1, S) * jnp.float32(-1e9)

    kernel = functools.partial(_encoder_kernel, num_heads)

    def b_map(b, l):          # per-batch-block (resident across the layer axis)
        return (b, 0, 0)

    def l_map(b, l):          # per-layer (next layer's weights prefetched behind compute)
        return (l, 0, 0)

    def c_map(b, l):          # constant (final LayerNorm params)
        return (0, 0)

    in_specs = [
        pl.BlockSpec((tb, S, D), b_map),           # x
        pl.BlockSpec((tb, 1, S), b_map),           # mask bias
        pl.BlockSpec((1, D, 3 * D), l_map),        # fused Wqkv (bf16)
        pl.BlockSpec((1, 1, 3 * D), l_map),        # fused bqkv
        pl.BlockSpec((1, D, D), l_map),            # Wo (bf16)
        pl.BlockSpec((1, 1, D), l_map),            # bo
        pl.BlockSpec((1, 1, D), l_map),            # ln1 gamma
        pl.BlockSpec((1, 1, D), l_map),            # ln1 beta
        pl.BlockSpec((1, D, d_ff), l_map),         # W1 (bf16)
        pl.BlockSpec((1, 1, d_ff), l_map),         # b1
        pl.BlockSpec((1, d_ff, D), l_map),         # W2 (bf16)
        pl.BlockSpec((1, 1, D), l_map),            # b2
        pl.BlockSpec((1, 1, D), l_map),            # ln2 gamma
        pl.BlockSpec((1, 1, D), l_map),            # ln2 beta
        pl.BlockSpec((1, D), c_map),               # final norm gamma
        pl.BlockSpec((1, D), c_map),               # final norm beta
    ]

    grid_spec = pltpu.PrefetchScalarGridSpec(
        num_scalar_prefetch=0,
        grid=(B // tb, L),
        in_specs=in_specs,
        out_specs=pl.BlockSpec((tb, S, D), b_map),
    )

    return pl.pallas_call(
        kernel,
        out_shape=jax.ShapeDtypeStruct((B, S, D), x.dtype),
        grid_spec=grid_spec,
        compiler_params=pltpu.CompilerParams(
            dimension_semantics=("parallel", "arbitrary"),
            vmem_limit_bytes=64 * 1024 * 1024),
    )(x, maskb,
      fused["wqkv"], fused["bqkv"], fused["wo"], fused["bo"],
      fused["g1"], fused["be1"], fused["w1"], fused["bf1"],
      fused["w2"], fused["bf2"], fused["g2"], fused["be2"],
      fused["norm_g"], fused["norm_b"])


# ----------------------------- pure-JAX reference --------------------------- #

def _ref_ln(v, g, b, eps=1e-5):
    mu = jnp.mean(v, axis=-1, keepdims=True)
    var = jnp.mean((v - mu) ** 2, axis=-1, keepdims=True)
    return (v - mu) * jax.lax.rsqrt(var + eps) * g + b


def reference_forward(x, mask, params, num_heads):
    B, S, D = x.shape
    hd = D // num_heads
    scale = 1.0 / jnp.sqrt(jnp.float32(hd))
    h = x
    for lp in params["layers"]:
        q = (h @ lp["wq"] + lp["bq"]).reshape(B, S, num_heads, hd).transpose(0, 2, 1, 3)
        k = (h @ lp["wk"] + lp["bk"]).reshape(B, S, num_heads, hd).transpose(0, 2, 1, 3)
        v = (h @ lp["wv"] + lp["bv"]).reshape(B, S, num_heads, hd).transpose(0, 2, 1, 3)
        s = jnp.einsum('bhqd,bhkd->bhqk', q, k) * scale
        s = jnp.where(mask[:, None, None, :] > 0, s, jnp.float32(-1e9))
        p = jax.nn.softmax(s, axis=-1)
        ctx = jnp.einsum('bhqk,bhkd->bhqd', p, v).transpose(0, 2, 1, 3).reshape(B, S, D)
        attn = ctx @ lp["wo"] + lp["bo"]
        h = _ref_ln(h + attn, lp["g1"], lp["be1"])
        ff = jnp.maximum(h @ lp["w1"] + lp["bf1"], 0.0) @ lp["w2"] + lp["bf2"]
        h = _ref_ln(h + ff, lp["g2"], lp["be2"])
    return _ref_ln(h, params["norm_g"], params["norm_b"])


# ----------------------------- param init ----------------------------------- #

def _linear_init(key, fan_in, fan_out):
    kw, kb = jax.random.split(key)
    bound = 1.0 / jnp.sqrt(jnp.float32(fan_in))
    w = jax.random.uniform(kw, (fan_in, fan_out), jnp.float32, -bound, bound)
    b = jax.random.uniform(kb, (1, fan_out), jnp.float32, -bound, bound)
    return w, b


def init_encoder_params(key, num_layers, d_model, d_ff):
    layers = []
    for _ in range(num_layers):
        keys = jax.random.split(key, 7)
        key = keys[0]
        wq, bq = _linear_init(keys[1], d_model, d_model)
        wk, bk = _linear_init(keys[2], d_model, d_model)
        wv, bv = _linear_init(keys[3], d_model, d_model)
        wo, bo = _linear_init(keys[4], d_model, d_model)
        w1, bf1 = _linear_init(keys[5], d_model, d_ff)
        w2, bf2 = _linear_init(keys[6], d_ff, d_model)
        layers.append(dict(
            wq=wq, bq=bq, wk=wk, bk=bk, wv=wv, bv=bv, wo=wo, bo=bo,
            g1=jnp.ones((1, d_model), jnp.float32),
            be1=jnp.zeros((1, d_model), jnp.float32),
            w1=w1, bf1=bf1, w2=w2, bf2=bf2,
            g2=jnp.ones((1, d_model), jnp.float32),
            be2=jnp.zeros((1, d_model), jnp.float32),
        ))
    return dict(
        layers=layers,
        norm_g=jnp.ones((1, d_model), jnp.float32),
        norm_b=jnp.zeros((1, d_model), jnp.float32),
    )


# ----------------------------- main ------------------------------------------ #

if __name__ == "__main__":
    num_layers = 2
    d_model = 32
    num_heads = 4
    d_ff = 64
    batch = 2
    seq = 8

    key = jax.random.PRNGKey(0)
    kx, kp, km = jax.random.split(key, 3)

    x = jax.random.normal(kx, (batch, seq, d_model), jnp.float32)
    # mask: 1 = attend, 0 = masked (last two key positions of batch 1 masked)
    mask = jnp.ones((batch, seq), jnp.float32)
    mask = mask.at[1, -2:].set(0.0)

    params = init_encoder_params(kp, num_layers, d_model, d_ff)
    fused = prepare_encoder_params(params, num_heads)   # one-time weight fusion

    out = encoder_forward(x, mask, fused, num_heads)
    out = jax.block_until_ready(out)
    assert out.shape == (batch, seq, d_model)

    ref = jax.block_until_ready(reference_forward(x, mask, params, num_heads))
    # bf16 matmul operands + approx softmax reciprocal vs. the f32 reference
    assert jnp.allclose(out, ref, atol=5e-2, rtol=5e-2), \
        float(jnp.max(jnp.abs(out - ref)))

    print("KERNEL_OK")
</pallas_src>

<mosaic_0001>
module attributes {stable_mosaic.version = 11 : i64} {
  func.func @_encoder_kernel(%arg0: i32, %arg1: i32, %arg2: memref<2x8x32xf32, #tpu.memory_space<vmem>>, %arg3: memref<2x1x8xf32, #tpu.memory_space<vmem>>, %arg4: memref<1x32x96xbf16, #tpu.memory_space<vmem>>, %arg5: memref<1x1x96xf32, #tpu.memory_space<vmem>>, %arg6: memref<1x32x32xbf16, #tpu.memory_space<vmem>>, %arg7: memref<1x1x32xf32, #tpu.memory_space<vmem>>, %arg8: memref<1x1x32xf32, #tpu.memory_space<vmem>>, %arg9: memref<1x1x32xf32, #tpu.memory_space<vmem>>, %arg10: memref<1x32x64xbf16, #tpu.memory_space<vmem>>, %arg11: memref<1x1x64xf32, #tpu.memory_space<vmem>>, %arg12: memref<1x64x32xbf16, #tpu.memory_space<vmem>>, %arg13: memref<1x1x32xf32, #tpu.memory_space<vmem>>, %arg14: memref<1x1x32xf32, #tpu.memory_space<vmem>>, %arg15: memref<1x1x32xf32, #tpu.memory_space<vmem>>, %arg16: memref<1x32xf32, #tpu.memory_space<vmem>>, %arg17: memref<1x32xf32, #tpu.memory_space<vmem>>, %arg18: memref<2x8x32xf32, #tpu.memory_space<vmem>>) attributes {dimension_semantics = [#tpu.dimension_semantics<parallel>, #tpu.dimension_semantics<arbitrary>], iteration_bounds = array<i64: 1, 2>, scalar_prefetch = 0 : i64, scratch_operands = 0 : i64, tpu.core_type = #tpu.core_type<tc>, window_params = [{transform_indices = @transform_0, window_bounds = array<i64: 2, 8, 32>}, {transform_indices = @transform_1, window_bounds = array<i64: 2, 1, 8>}, {transform_indices = @transform_2, window_bounds = array<i64: 1, 32, 96>}, {transform_indices = @transform_3, window_bounds = array<i64: 1, 1, 96>}, {transform_indices = @transform_4, window_bounds = array<i64: 1, 32, 32>}, {transform_indices = @transform_5, window_bounds = array<i64: 1, 1, 32>}, {transform_indices = @transform_6, window_bounds = array<i64: 1, 1, 32>}, {transform_indices = @transform_7, window_bounds = array<i64: 1, 1, 32>}, {transform_indices = @transform_8, window_bounds = array<i64: 1, 32, 64>}, {transform_indices = @transform_9, window_bounds = array<i64: 1, 1, 64>}, {transform_indices = @transform_10, window_bounds = array<i64: 1, 64, 32>}, {transform_indices = @transform_11, window_bounds = array<i64: 1, 1, 32>}, {transform_indices = @transform_12, window_bounds = array<i64: 1, 1, 32>}, {transform_indices = @transform_13, window_bounds = array<i64: 1, 1, 32>}, {pipeline_mode = #tpu.pipeline_mode<synchronous>, transform_indices = @transform_14, window_bounds = array<i64: 1, 32>}, {pipeline_mode = #tpu.pipeline_mode<synchronous>, transform_indices = @transform_15, window_bounds = array<i64: 1, 32>}, {transform_indices = @transform_16, window_bounds = array<i64: 2, 8, 32>}]} {
    %c0_i32 = arith.constant 0 : i32
    %0 = arith.cmpi eq, %arg1, %c0_i32 : i32
    %1 = arith.extui %0 : i1 to i32
    %c0_i32_0 = arith.constant 0 : i32
    %2 = arith.cmpi ne, %1, %c0_i32_0 : i32
    scf.if %2 {
      %c0_75 = arith.constant 0 : index
      %c0_76 = arith.constant 0 : index
      %c0_77 = arith.constant 0 : index
      %198 = vector.load %arg2[%c0_75, %c0_76, %c0_77] : memref<2x8x32xf32, #tpu.memory_space<vmem>>, vector<2x8x32xf32>
      %c0_78 = arith.constant 0 : index
      %c0_79 = arith.constant 0 : index
      %c0_80 = arith.constant 0 : index
      %199 = vector.load %arg18[%c0_78, %c0_79, %c0_80] : memref<2x8x32xf32, #tpu.memory_space<vmem>>, vector<2x8x32xf32>
      tpu.vector_store %arg18[%c0_78, %c0_79, %c0_80], %198 {strides = array<i32>} : memref<2x8x32xf32, #tpu.memory_space<vmem>>, vector<2x8x32xf32>,
    } else {
    }
    %c0 = arith.constant 0 : index
    %c0_1 = arith.constant 0 : index
    %c0_2 = arith.constant 0 : index
    %3 = vector.load %arg18[%c0, %c0_1, %c0_2] : memref<2x8x32xf32, #tpu.memory_space<vmem>>, vector<2x8x32xf32>
    %4 = vector.shape_cast %3 : vector<2x8x32xf32> to vector<16x32xf32>
    %5 = arith.truncf %4 : vector<16x32xf32> to vector<16x32xbf16>
    %c0_3 = arith.constant 0 : index
    %c0_4 = arith.constant 0 : index
    %c0_5 = arith.constant 0 : index
    %6 = vector.load %arg4[%c0_3, %c0_4, %c0_5] : memref<1x32x96xbf16, #tpu.memory_space<vmem>>, vector<1x32x96xbf16>
    %7 = vector.shape_cast %6 : vector<1x32x96xbf16> to vector<32x96xbf16>
    %cst = arith.constant dense<0.000000e+00> : vector<16x96xf32>
    %8 = tpu.matmul %5, %7, %cst {dimension_numbers = #tpu.dot_dimension_numbers<[1], [0], [0], [1], [0, 0, 1, 1], [], []>} : vector<16x32xbf16>, vector<32x96xbf16>, vector<16x96xf32> -> vector<16x96xf32>
    %c0_6 = arith.constant 0 : index
    %c0_7 = arith.constant 0 : index
    %c0_8 = arith.constant 0 : index
    %9 = vector.load %arg5[%c0_6, %c0_7, %c0_8] : memref<1x1x96xf32, #tpu.memory_space<vmem>>, vector<1x1x96xf32>
    %10 = vector.shape_cast %9 : vector<1x1x96xf32> to vector<1x96xf32>
    %11 = vector.broadcast %10 : vector<1x96xf32> to vector<16x96xf32>
    %12 = arith.addf %8, %11 : vector<16x96xf32>
    %c0_9 = arith.constant 0 : index
    %c0_10 = arith.constant 0 : index
    %c0_11 = arith.constant 0 : index
    %13 = vector.load %arg3[%c0_9, %c0_10, %c0_11] : memref<2x1x8xf32, #tpu.memory_space<vmem>>, vector<2x1x8xf32>
    %14 = vector.extract_strided_slice %12 {offsets = [0, 0], sizes = [16, 8], strides = [1, 1]} : vector<16x96xf32> to vector<16x8xf32>
    %15 = vector.shape_cast %14 : vector<16x8xf32> to vector<2x8x8xf32>
    %16 = vector.extract_strided_slice %12 {offsets = [0, 32], sizes = [16, 8], strides = [1, 1]} : vector<16x96xf32> to vector<16x8xf32>
    %17 = vector.shape_cast %16 : vector<16x8xf32> to vector<2x8x8xf32>
    %18 = vector.extract_strided_slice %12 {offsets = [0, 64], sizes = [16, 8], strides = [1, 1]} : vector<16x96xf32> to vector<16x8xf32>
    %19 = vector.shape_cast %18 : vector<16x8xf32> to vector<2x8x8xf32>
    %20 = arith.truncf %15 : vector<2x8x8xf32> to vector<2x8x8xbf16>
    %21 = arith.truncf %17 : vector<2x8x8xf32> to vector<2x8x8xbf16>
    "tpu.trace_start"() <{level = 10 : i32, message = "bqd,bkd->bqk"}> : () -> ()
    %cst_12 = arith.constant dense<0.000000e+00> : vector<2x8x8xf32>
    %22 = tpu.matmul %20, %21, %cst_12 {dimension_numbers = #tpu.dot_dimension_numbers<[2], [2], [1], [1], [0, 0, 0, 1, 1, 1], [0], [0]>} : vector<2x8x8xbf16>, vector<2x8x8xbf16>, vector<2x8x8xf32> -> vector<2x8x8xf32>
    "tpu.trace_stop"() : () -> ()
    %23 = vector.broadcast %13 : vector<2x1x8xf32> to vector<2x8x8xf32>
    %24 = arith.addf %22, %23 : vector<2x8x8xf32>
    %cst_13 = arith.constant dense<0xFF800000> : vector<2x8xf32>
    %25 = vector.multi_reduction <maximumf>, %24, %cst_13 [2] : vector<2x8x8xf32> to vector<2x8xf32>
    %26 = vector.shape_cast %25 : vector<2x8xf32> to vector<2x8x1xf32>
    %27 = vector.broadcast %26 : vector<2x8x1xf32> to vector<2x8x8xf32>
    %28 = arith.subf %24, %27 : vector<2x8x8xf32>
    %29 = math.exp %28 : vector<2x8x8xf32>
    %cst_14 = arith.constant dense<0.000000e+00> : vector<2x8xf32>
    %30 = vector.multi_reduction <add>, %29, %cst_14 [2] : vector<2x8x8xf32> to vector<2x8xf32>
    %31 = vector.shape_cast %30 : vector<2x8xf32> to vector<2x8x1xf32>
    %32 = tpu.reciprocal %31 {approx = true} : vector<2x8x1xf32> -> vector<2x8x1xf32>
    %33 = vector.broadcast %32 : vector<2x8x1xf32> to vector<2x8x8xf32>
    %34 = arith.mulf %29, %33 : vector<2x8x8xf32>
    %35 = arith.truncf %34 : vector<2x8x8xf32> to vector<2x8x8xbf16>
    %36 = arith.truncf %19 : vector<2x8x8xf32> to vector<2x8x8xbf16>
    "tpu.trace_start"() <{level = 10 : i32, message = "bqk,bkd->bqd"}> : () -> ()
    %cst_15 = arith.constant dense<0.000000e+00> : vector<2x8x8xf32>
    %37 = tpu.matmul %35, %36, %cst_15 {dimension_numbers = #tpu.dot_dimension_numbers<[2], [1], [1], [2], [0, 0, 0, 1, 1, 2], [0], [0]>} : vector<2x8x8xbf16>, vector<2x8x8xbf16>, vector<2x8x8xf32> -> vector<2x8x8xf32>
    "tpu.trace_stop"() : () -> ()
    %38 = vector.extract_strided_slice %12 {offsets = [0, 8], sizes = [16, 8], strides = [1, 1]} : vector<16x96xf32> to vector<16x8xf32>
    %39 = vector.shape_cast %38 : vector<16x8xf32> to vector<2x8x8xf32>
    %40 = vector.extract_strided_slice %12 {offsets = [0, 40], sizes = [16, 8], strides = [1, 1]} : vector<16x96xf32> to vector<16x8xf32>
    %41 = vector.shape_cast %40 : vector<16x8xf32> to vector<2x8x8xf32>
    %42 = vector.extract_strided_slice %12 {offsets = [0, 72], sizes = [16, 8], strides = [1, 1]} : vector<16x96xf32> to vector<16x8xf32>
    %43 = vector.shape_cast %42 : vector<16x8xf32> to vector<2x8x8xf32>
    %44 = arith.truncf %39 : vector<2x8x8xf32> to vector<2x8x8xbf16>
    %45 = arith.truncf %41 : vector<2x8x8xf32> to vector<2x8x8xbf16>
    "tpu.trace_start"() <{level = 10 : i32, message = "bqd,bkd->bqk"}> : () -> ()
    %cst_16 = arith.constant dense<0.000000e+00> : vector<2x8x8xf32>
    %46 = tpu.matmul %44, %45, %cst_16 {dimension_numbers = #tpu.dot_dimension_numbers<[2], [2], [1], [1], [0, 0, 0, 1, 1, 1], [0], [0]>} : vector<2x8x8xbf16>, vector<2x8x8xbf16>, vector<2x8x8xf32> -> vector<2x8x8xf32>
    "tpu.trace_stop"() : () -> ()
    %47 = vector.broadcast %13 : vector<2x1x8xf32> to vector<2x8x8xf32>
    %48 = arith.addf %46, %47 : vector<2x8x8xf32>
    %cst_17 = arith.constant dense<0xFF800000> : vector<2x8xf32>
    %49 = vector.multi_reduction <maximumf>, %48, %cst_17 [2] : vector<2x8x8xf32> to vector<2x8xf32>
    %50 = vector.shape_cast %49 : vector<2x8xf32> to vector<2x8x1xf32>
    %51 = vector.broadcast %50 : vector<2x8x1xf32> to vector<2x8x8xf32>
    %52 = arith.subf %48, %51 : vector<2x8x8xf32>
    %53 = math.exp %52 : vector<2x8x8xf32>
    %cst_18 = arith.constant dense<0.000000e+00> : vector<2x8xf32>
    %54 = vector.multi_reduction <add>, %53, %cst_18 [2] : vector<2x8x8xf32> to vector<2x8xf32>
    %55 = vector.shape_cast %54 : vector<2x8xf32> to vector<2x8x1xf32>
    %56 = tpu.reciprocal %55 {approx = true} : vector<2x8x1xf32> -> vector<2x8x1xf32>
    %57 = vector.broadcast %56 : vector<2x8x1xf32> to vector<2x8x8xf32>
    %58 = arith.mulf %53, %57 : vector<2x8x8xf32>
    %59 = arith.truncf %58 : vector<2x8x8xf32> to vector<2x8x8xbf16>
    %60 = arith.truncf %43 : vector<2x8x8xf32> to vector<2x8x8xbf16>
    "tpu.trace_start"() <{level = 10 : i32, message = "bqk,bkd->bqd"}> : () -> ()
    %cst_19 = arith.constant dense<0.000000e+00> : vector<2x8x8xf32>
    %61 = tpu.matmul %59, %60, %cst_19 {dimension_numbers = #tpu.dot_dimension_numbers<[2], [1], [1], [2], [0, 0, 0, 1, 1, 2], [0], [0]>} : vector<2x8x8xbf16>, vector<2x8x8xbf16>, vector<2x8x8xf32> -> vector<2x8x8xf32>
    "tpu.trace_stop"() : () -> ()
    %62 = vector.extract_strided_slice %12 {offsets = [0, 16], sizes = [16, 8], strides = [1, 1]} : vector<16x96xf32> to vector<16x8xf32>
    %63 = vector.shape_cast %62 : vector<16x8xf32> to vector<2x8x8xf32>
    %64 = vector.extract_strided_slice %12 {offsets = [0, 48], sizes = [16, 8], strides = [1, 1]} : vector<16x96xf32> to vector<16x8xf32>
    %65 = vector.shape_cast %64 : vector<16x8xf32> to vector<2x8x8xf32>
    %66 = vector.extract_strided_slice %12 {offsets = [0, 80], sizes = [16, 8], strides = [1, 1]} : vector<16x96xf32> to vector<16x8xf32>
    %67 = vector.shape_cast %66 : vector<16x8xf32> to vector<2x8x8xf32>
    %68 = arith.truncf %63 : vector<2x8x8xf32> to vector<2x8x8xbf16>
    %69 = arith.truncf %65 : vector<2x8x8xf32> to vector<2x8x8xbf16>
    "tpu.trace_start"() <{level = 10 : i32, message = "bqd,bkd->bqk"}> : () -> ()
    %cst_20 = arith.constant dense<0.000000e+00> : vector<2x8x8xf32>
    %70 = tpu.matmul %68, %69, %cst_20 {dimension_numbers = #tpu.dot_dimension_numbers<[2], [2], [1], [1], [0, 0, 0, 1, 1, 1], [0], [0]>} : vector<2x8x8xbf16>, vector<2x8x8xbf16>, vector<2x8x8xf32> -> vector<2x8x8xf32>
    "tpu.trace_stop"() : () -> ()
    %71 = vector.broadcast %13 : vector<2x1x8xf32> to vector<2x8x8xf32>
    %72 = arith.addf %70, %71 : vector<2x8x8xf32>
    %cst_21 = arith.constant dense<0xFF800000> : vector<2x8xf32>
    %73 = vector.multi_reduction <maximumf>, %72, %cst_21 [2] : vector<2x8x8xf32> to vector<2x8xf32>
    %74 = vector.shape_cast %73 : vector<2x8xf32> to vector<2x8x1xf32>
    %75 = vector.broadcast %74 : vector<2x8x1xf32> to vector<2x8x8xf32>
    %76 = arith.subf %72, %75 : vector<2x8x8xf32>
    %77 = math.exp %76 : vector<2x8x8xf32>
    %cst_22 = arith.constant dense<0.000000e+00> : vector<2x8xf32>
    %78 = vector.multi_reduction <add>, %77, %cst_22 [2] : vector<2x8x8xf32> to vector<2x8xf32>
    %79 = vector.shape_cast %78 : vector<2x8xf32> to vector<2x8x1xf32>
    %80 = tpu.reciprocal %79 {approx = true} : vector<2x8x1xf32> -> vector<2x8x1xf32>
    %81 = vector.broadcast %80 : vector<2x8x1xf32> to vector<2x8x8xf32>
    %82 = arith.mulf %77, %81 : vector<2x8x8xf32>
    %83 = arith.truncf %82 : vector<2x8x8xf32> to vector<2x8x8xbf16>
    %84 = arith.truncf %67 : vector<2x8x8xf32> to vector<2x8x8xbf16>
    "tpu.trace_start"() <{level = 10 : i32, message = "bqk,bkd->bqd"}> : () -> ()
    %cst_23 = arith.constant dense<0.000000e+00> : vector<2x8x8xf32>
    %85 = tpu.matmul %83, %84, %cst_23 {dimension_numbers = #tpu.dot_dimension_numbers<[2], [1], [1], [2], [0, 0, 0, 1, 1, 2], [0], [0]>} : vector<2x8x8xbf16>, vector<2x8x8xbf16>, vector<2x8x8xf32> -> vector<2x8x8xf32>
    "tpu.trace_stop"() : () -> ()
    %86 = vector.extract_strided_slice %12 {offsets = [0, 24], sizes = [16, 8], strides = [1, 1]} : vector<16x96xf32> to vector<16x8xf32>
    %87 = vector.shape_cast %86 : vector<16x8xf32> to vector<2x8x8xf32>
    %88 = vector.extract_strided_slice %12 {offsets = [0, 56], sizes = [16, 8], strides = [1, 1]} : vector<16x96xf32> to vector<16x8xf32>
    %89 = vector.shape_cast %88 : vector<16x8xf32> to vector<2x8x8xf32>
    %90 = vector.extract_strided_slice %12 {offsets = [0, 88], sizes = [16, 8], strides = [1, 1]} : vector<16x96xf32> to vector<16x8xf32>
    %91 = vector.shape_cast %90 : vector<16x8xf32> to vector<2x8x8xf32>
    %92 = arith.truncf %87 : vector<2x8x8xf32> to vector<2x8x8xbf16>
    %93 = arith.truncf %89 : vector<2x8x8xf32> to vector<2x8x8xbf16>
    "tpu.trace_start"() <{level = 10 : i32, message = "bqd,bkd->bqk"}> : () -> ()
    %cst_24 = arith.constant dense<0.000000e+00> : vector<2x8x8xf32>
    %94 = tpu.matmul %92, %93, %cst_24 {dimension_numbers = #tpu.dot_dimension_numbers<[2], [2], [1], [1], [0, 0, 0, 1, 1, 1], [0], [0]>} : vector<2x8x8xbf16>, vector<2x8x8xbf16>, vector<2x8x8xf32> -> vector<2x8x8xf32>
    "tpu.trace_stop"() : () -> ()
    %95 = vector.broadcast %13 : vector<2x1x8xf32> to vector<2x8x8xf32>
    %96 = arith.addf %94, %95 : vector<2x8x8xf32>
    %cst_25 = arith.constant dense<0xFF800000> : vector<2x8xf32>
    %97 = vector.multi_reduction <maximumf>, %96, %cst_25 [2] : vector<2x8x8xf32> to vector<2x8xf32>
    %98 = vector.shape_cast %97 : vector<2x8xf32> to vector<2x8x1xf32>
    %99 = vector.broadcast %98 : vector<2x8x1xf32> to vector<2x8x8xf32>
    %100 = arith.subf %96, %99 : vector<2x8x8xf32>
    %101 = math.exp %100 : vector<2x8x8xf32>
    %cst_26 = arith.constant dense<0.000000e+00> : vector<2x8xf32>
    %102 = vector.multi_reduction <add>, %101, %cst_26 [2] : vector<2x8x8xf32> to vector<2x8xf32>
    %103 = vector.shape_cast %102 : vector<2x8xf32> to vector<2x8x1xf32>
    %104 = tpu.reciprocal %103 {approx = true} : vector<2x8x1xf32> -> vector<2x8x1xf32>
    %105 = vector.broadcast %104 : vector<2x8x1xf32> to vector<2x8x8xf32>
    %106 = arith.mulf %101, %105 : vector<2x8x8xf32>
    %107 = arith.truncf %106 : vector<2x8x8xf32> to vector<2x8x8xbf16>
    %108 = arith.truncf %91 : vector<2x8x8xf32> to vector<2x8x8xbf16>
    "tpu.trace_start"() <{level = 10 : i32, message = "bqk,bkd->bqd"}> : () -> ()
    %cst_27 = arith.constant dense<0.000000e+00> : vector<2x8x8xf32>
    %109 = tpu.matmul %107, %108, %cst_27 {dimension_numbers = #tpu.dot_dimension_numbers<[2], [1], [1], [2], [0, 0, 0, 1, 1, 2], [0], [0]>} : vector<2x8x8xbf16>, vector<2x8x8xbf16>, vector<2x8x8xf32> -> vector<2x8x8xf32>
    "tpu.trace_stop"() : () -> ()
    %110 = tpu.concatenate %37, %61, %85, %109 in 2 : vector<2x8x8xf32>, vector<2x8x8xf32>, vector<2x8x8xf32>, vector<2x8x8xf32> -> vector<2x8x32xf32>
    %111 = vector.shape_cast %110 : vector<2x8x32xf32> to vector<16x32xf32>
    %112 = arith.truncf %111 : vector<16x32xf32> to vector<16x32xbf16>
    %c0_28 = arith.constant 0 : index
    %c0_29 = arith.constant 0 : index
    %c0_30 = arith.constant 0 : index
    %113 = vector.load %arg6[%c0_28, %c0_29, %c0_30] : memref<1x32x32xbf16, #tpu.memory_space<vmem>>, vector<1x32x32xbf16>
    %114 = vector.shape_cast %113 : vector<1x32x32xbf16> to vector<32x32xbf16>
    %cst_31 = arith.constant dense<0.000000e+00> : vector<16x32xf32>
    %115 = tpu.matmul %112, %114, %cst_31 {dimension_numbers = #tpu.dot_dimension_numbers<[1], [0], [0], [1], [0, 0, 1, 1], [], []>} : vector<16x32xbf16>, vector<32x32xbf16>, vector<16x32xf32> -> vector<16x32xf32>
    %c0_32 = arith.constant 0 : index
    %c0_33 = arith.constant 0 : index
    %c0_34 = arith.constant 0 : index
    %116 = vector.load %arg7[%c0_32, %c0_33, %c0_34] : memref<1x1x32xf32, #tpu.memory_space<vmem>>, vector<1x1x32xf32>
    %117 = vector.shape_cast %116 : vector<1x1x32xf32> to vector<1x32xf32>
    %118 = vector.broadcast %117 : vector<1x32xf32> to vector<16x32xf32>
    %119 = arith.addf %115, %118 : vector<16x32xf32>
    %120 = arith.addf %4, %119 : vector<16x32xf32>
    %c0_35 = arith.constant 0 : index
    %c0_36 = arith.constant 0 : index
    %c0_37 = arith.constant 0 : index
    %121 = vector.load %arg8[%c0_35, %c0_36, %c0_37] : memref<1x1x32xf32, #tpu.memory_space<vmem>>, vector<1x1x32xf32>
    %122 = vector.shape_cast %121 : vector<1x1x32xf32> to vector<1x32xf32>
    %c0_38 = arith.constant 0 : index
    %c0_39 = arith.constant 0 : index
    %c0_40 = arith.constant 0 : index
    %123 = vector.load %arg9[%c0_38, %c0_39, %c0_40] : memref<1x1x32xf32, #tpu.memory_space<vmem>>, vector<1x1x32xf32>
    %124 = vector.shape_cast %123 : vector<1x1x32xf32> to vector<1x32xf32>
    %cst_41 = arith.constant dense<0.000000e+00> : vector<16xf32>
    %125 = vector.multi_reduction <add>, %120, %cst_41 [1] : vector<16x32xf32> to vector<16xf32>
    %126 = vector.shape_cast %125 : vector<16xf32> to vector<16x1xf32>
    %cst_42 = arith.constant 3.200000e+01 : f32
    %127 = vector.broadcast %cst_42 : f32 to vector<16x1xf32>
    %128 = arith.divf %126, %127 : vector<16x1xf32>
    %129 = vector.broadcast %128 : vector<16x1xf32> to vector<16x32xf32>
    %130 = arith.subf %120, %129 : vector<16x32xf32>
    %131 = arith.mulf %130, %130 : vector<16x32xf32>
    %cst_43 = arith.constant dense<0.000000e+00> : vector<16xf32>
    %132 = vector.multi_reduction <add>, %131, %cst_43 [1] : vector<16x32xf32> to vector<16xf32>
    %133 = vector.shape_cast %132 : vector<16xf32> to vector<16x1xf32>
    %cst_44 = arith.constant 3.200000e+01 : f32
    %134 = vector.broadcast %cst_44 : f32 to vector<16x1xf32>
    %135 = arith.divf %133, %134 : vector<16x1xf32>
    %136 = vector.broadcast %128 : vector<16x1xf32> to vector<16x32xf32>
    %137 = arith.subf %120, %136 : vector<16x32xf32>
    %cst_45 = arith.constant 9.99999974E-6 : f32
    %138 = vector.broadcast %cst_45 : f32 to vector<16x1xf32>
    %139 = arith.addf %135, %138 : vector<16x1xf32>
    %140 = math.rsqrt %139 : vector<16x1xf32>
    %141 = vector.broadcast %140 : vector<16x1xf32> to vector<16x32xf32>
    %142 = arith.mulf %137, %141 : vector<16x32xf32>
    %143 = vector.broadcast %122 : vector<1x32xf32> to vector<16x32xf32>
    %144 = arith.mulf %142, %143 : vector<16x32xf32>
    %145 = vector.broadcast %124 : vector<1x32xf32> to vector<16x32xf32>
    %146 = arith.addf %144, %145 : vector<16x32xf32>
    %147 = arith.truncf %146 : vector<16x32xf32> to vector<16x32xbf16>
    %c0_46 = arith.constant 0 : index
    %c0_47 = arith.constant 0 : index
    %c0_48 = arith.constant 0 : index
    %148 = vector.load %arg10[%c0_46, %c0_47, %c0_48] : memref<1x32x64xbf16, #tpu.memory_space<vmem>>, vector<1x32x64xbf16>
    %149 = vector.shape_cast %148 : vector<1x32x64xbf16> to vector<32x64xbf16>
    %cst_49 = arith.constant dense<0.000000e+00> : vector<16x64xf32>
    %150 = tpu.matmul %147, %149, %cst_49 {dimension_numbers = #tpu.dot_dimension_numbers<[1], [0], [0], [1], [0, 0, 1, 1], [], []>} : vector<16x32xbf16>, vector<32x64xbf16>, vector<16x64xf32> -> vector<16x64xf32>
    %c0_50 = arith.constant 0 : index
    %c0_51 = arith.constant 0 : index
    %c0_52 = arith.constant 0 : index
    %151 = vector.load %arg11[%c0_50, %c0_51, %c0_52] : memref<1x1x64xf32, #tpu.memory_space<vmem>>, vector<1x1x64xf32>
    %152 = vector.shape_cast %151 : vector<1x1x64xf32> to vector<1x64xf32>
    %153 = vector.broadcast %152 : vector<1x64xf32> to vector<16x64xf32>
    %154 = arith.addf %150, %153 : vector<16x64xf32>
    %cst_53 = arith.constant 0.000000e+00 : f32
    %155 = vector.broadcast %cst_53 : f32 to vector<16x64xf32>
    %156 = arith.maximumf %154, %155 : vector<16x64xf32>
    %157 = arith.truncf %156 : vector<16x64xf32> to vector<16x64xbf16>
    %c0_54 = arith.constant 0 : index
    %c0_55 = arith.constant 0 : index
    %c0_56 = arith.constant 0 : index
    %158 = vector.load %arg12[%c0_54, %c0_55, %c0_56] : memref<1x64x32xbf16, #tpu.memory_space<vmem>>, vector<1x64x32xbf16>
    %159 = vector.shape_cast %158 : vector<1x64x32xbf16> to vector<64x32xbf16>
    %cst_57 = arith.constant dense<0.000000e+00> : vector<16x32xf32>
    %160 = tpu.matmul %157, %159, %cst_57 {dimension_numbers = #tpu.dot_dimension_numbers<[1], [0], [0], [1], [0, 0, 1, 1], [], []>} : vector<16x64xbf16>, vector<64x32xbf16>, vector<16x32xf32> -> vector<16x32xf32>
    %c0_58 = arith.constant 0 : index
    %c0_59 = arith.constant 0 : index
    %c0_60 = arith.constant 0 : index
    %161 = vector.load %arg13[%c0_58, %c0_59, %c0_60] : memref<1x1x32xf32, #tpu.memory_space<vmem>>, vector<1x1x32xf32>
    %162 = vector.shape_cast %161 : vector<1x1x32xf32> to vector<1x32xf32>
    %163 = vector.broadcast %162 : vector<1x32xf32> to vector<16x32xf32>
    %164 = arith.addf %160, %163 : vector<16x32xf32>
    %165 = arith.addf %146, %164 : vector<16x32xf32>
    %c0_61 = arith.constant 0 : index
    %c0_62 = arith.constant 0 : index
    %c0_63 = arith.constant 0 : index
    %166 = vector.load %arg14[%c0_61, %c0_62, %c0_63] : memref<1x1x32xf32, #tpu.memory_space<vmem>>, vector<1x1x32xf32>
    %167 = vector.shape_cast %166 : vector<1x1x32xf32> to vector<1x32xf32>
    %c0_64 = arith.constant 0 : index
    %c0_65 = arith.constant 0 : index
    %c0_66 = arith.constant 0 : index
    %168 = vector.load %arg15[%c0_64, %c0_65, %c0_66] : memref<1x1x32xf32, #tpu.memory_space<vmem>>, vector<1x1x32xf32>
    %169 = vector.shape_cast %168 : vector<1x1x32xf32> to vector<1x32xf32>
    %cst_67 = arith.constant dense<0.000000e+00> : vector<16xf32>
    %170 = vector.multi_reduction <add>, %165, %cst_67 [1] : vector<16x32xf32> to vector<16xf32>
    %171 = vector.shape_cast %170 : vector<16xf32> to vector<16x1xf32>
    %cst_68 = arith.constant 3.200000e+01 : f32
    %172 = vector.broadcast %cst_68 : f32 to vector<16x1xf32>
    %173 = arith.divf %171, %172 : vector<16x1xf32>
    %174 = vector.broadcast %173 : vector<16x1xf32> to vector<16x32xf32>
    %175 = arith.subf %165, %174 : vector<16x32xf32>
    %176 = arith.mulf %175, %175 : vector<16x32xf32>
    %cst_69 = arith.constant dense<0.000000e+00> : vector<16xf32>
    %177 = vector.multi_reduction <add>, %176, %cst_69 [1] : vector<16x32xf32> to vector<16xf32>
    %178 = vector.shape_cast %177 : vector<16xf32> to vector<16x1xf32>
    %cst_70 = arith.constant 3.200000e+01 : f32
    %179 = vector.broadcast %cst_70 : f32 to vector<16x1xf32>
    %180 = arith.divf %178, %179 : vector<16x1xf32>
    %181 = vector.broadcast %173 : vector<16x1xf32> to vector<16x32xf32>
    %182 = arith.subf %165, %181 : vector<16x32xf32>
    %cst_71 = arith.constant 9.99999974E-6 : f32
    %183 = vector.broadcast %cst_71 : f32 to vector<16x1xf32>
    %184 = arith.addf %180, %183 : vector<16x1xf32>
    %185 = math.rsqrt %184 : vector<16x1xf32>
    %186 = vector.broadcast %185 : vector<16x1xf32> to vector<16x32xf32>
    %187 = arith.mulf %182, %186 : vector<16x32xf32>
    %188 = vector.broadcast %167 : vector<1x32xf32> to vector<16x32xf32>
    %189 = arith.mulf %187, %188 : vector<16x32xf32>
    %190 = vector.broadcast %169 : vector<1x32xf32> to vector<16x32xf32>
    %191 = arith.addf %189, %190 : vector<16x32xf32>
    %c1_i32 = arith.constant 1 : i32
    %192 = arith.cmpi ne, %arg1, %c1_i32 : i32
    %193 = arith.extui %192 : i1 to i32
    %c0_i32_72 = arith.constant 0 : i32
    %194 = arith.cmpi ne, %193, %c0_i32_72 : i32
    scf.if %194 {
      %198 = vector.shape_cast %191 : vector<16x32xf32> to vector<2x8x32xf32>
      %c0_75 = arith.constant 0 : index
      %c0_76 = arith.constant 0 : index
      %c0_77 = arith.constant 0 : index
      %199 = vector.load %arg18[%c0_75, %c0_76, %c0_77] : memref<2x8x32xf32, #tpu.memory_space<vmem>>, vector<2x8x32xf32>
      tpu.vector_store %arg18[%c0_75, %c0_76, %c0_77], %198 {strides = array<i32>} : memref<2x8x32xf32, #tpu.memory_space<vmem>>, vector<2x8x32xf32>,
    } else {
    }
    %c1_i32_73 = arith.constant 1 : i32
    %195 = arith.cmpi eq, %arg1, %c1_i32_73 : i32
    %196 = arith.extui %195 : i1 to i32
    %c0_i32_74 = arith.constant 0 : i32
    %197 = arith.cmpi ne, %196, %c0_i32_74 : i32
    scf.if %197 {
      %c0_75 = arith.constant 0 : index
      %c0_76 = arith.constant 0 : index
      %198 = vector.load %arg16[%c0_75, %c0_76] : memref<1x32xf32, #tpu.memory_space<vmem>>, vector<1x32xf32>
      %c0_77 = arith.constant 0 : index
      %c0_78 = arith.constant 0 : index
      %199 = vector.load %arg17[%c0_77, %c0_78] : memref<1x32xf32, #tpu.memory_space<vmem>>, vector<1x32xf32>
      %cst_79 = arith.constant dense<0.000000e+00> : vector<16xf32>
      %200 = vector.multi_reduction <add>, %191, %cst_79 [1] : vector<16x32xf32> to vector<16xf32>
      %201 = vector.shape_cast %200 : vector<16xf32> to vector<16x1xf32>
      %cst_80 = arith.constant 3.200000e+01 : f32
      %202 = vector.broadcast %cst_80 : f32 to vector<16x1xf32>
      %203 = arith.divf %201, %202 : vector<16x1xf32>
      %204 = vector.broadcast %203 : vector<16x1xf32> to vector<16x32xf32>
      %205 = arith.subf %191, %204 : vector<16x32xf32>
      %206 = arith.mulf %205, %205 : vector<16x32xf32>
      %cst_81 = arith.constant dense<0.000000e+00> : vector<16xf32>
      %207 = vector.multi_reduction <add>, %206, %cst_81 [1] : vector<16x32xf32> to vector<16xf32>
      %208 = vector.shape_cast %207 : vector<16xf32> to vector<16x1xf32>
      %cst_82 = arith.constant 3.200000e+01 : f32
      %209 = vector.broadcast %cst_82 : f32 to vector<16x1xf32>
      %210 = arith.divf %208, %209 : vector<16x1xf32>
      %211 = vector.broadcast %203 : vector<16x1xf32> to vector<16x32xf32>
      %212 = arith.subf %191, %211 : vector<16x32xf32>
      %cst_83 = arith.constant 9.99999974E-6 : f32
      %213 = vector.broadcast %cst_83 : f32 to vector<16x1xf32>
      %214 = arith.addf %210, %213 : vector<16x1xf32>
      %215 = math.rsqrt %214 : vector<16x1xf32>
      %216 = vector.broadcast %215 : vector<16x1xf32> to vector<16x32xf32>
      %217 = arith.mulf %212, %216 : vector<16x32xf32>
      %218 = vector.broadcast %198 : vector<1x32xf32> to vector<16x32xf32>
      %219 = arith.mulf %217, %218 : vector<16x32xf32>
      %220 = vector.broadcast %199 : vector<1x32xf32> to vector<16x32xf32>
      %221 = arith.addf %219, %220 : vector<16x32xf32>
      %222 = vector.shape_cast %221 : vector<16x32xf32> to vector<2x8x32xf32>
      %c0_84 = arith.constant 0 : index
      %c0_85 = arith.constant 0 : index
      %c0_86 = arith.constant 0 : index
      %223 = vector.load %arg18[%c0_84, %c0_85, %c0_86] : memref<2x8x32xf32, #tpu.memory_space<vmem>>, vector<2x8x32xf32>
      tpu.vector_store %arg18[%c0_84, %c0_85, %c0_86], %222 {strides = array<i32>} : memref<2x8x32xf32, #tpu.memory_space<vmem>>, vector<2x8x32xf32>,
    } else {
    }
    return
  }
  func.func @transform_0(%arg0: i32, %arg1: i32) -> (i32, i32, i32) {
    %c0_i32 = arith.constant 0 : i32
    %c0_i32_0 = arith.constant 0 : i32
    %c0_i32_1 = arith.constant 0 : i32
    return %arg0, %c0_i32, %c0_i32_0 : i32, i32, i32
  }
  func.func @transform_1(%arg0: i32, %arg1: i32) -> (i32, i32, i32) {
    %c0_i32 = arith.constant 0 : i32
    %c0_i32_0 = arith.constant 0 : i32
    %c0_i32_1 = arith.constant 0 : i32
    return %arg0, %c0_i32, %c0_i32_0 : i32, i32, i32
  }
  func.func @transform_2(%arg0: i32, %arg1: i32) -> (i32, i32, i32) {
    %c0_i32 = arith.constant 0 : i32
    %c0_i32_0 = arith.constant 0 : i32
    %c0_i32_1 = arith.constant 0 : i32
    return %arg1, %c0_i32, %c0_i32_0 : i32, i32, i32
  }
  func.func @transform_3(%arg0: i32, %arg1: i32) -> (i32, i32, i32) {
    %c0_i32 = arith.constant 0 : i32
    %c0_i32_0 = arith.constant 0 : i32
    %c0_i32_1 = arith.constant 0 : i32
    return %arg1, %c0_i32, %c0_i32_0 : i32, i32, i32
  }
  func.func @transform_4(%arg0: i32, %arg1: i32) -> (i32, i32, i32) {
    %c0_i32 = arith.constant 0 : i32
    %c0_i32_0 = arith.constant 0 : i32
    %c0_i32_1 = arith.constant 0 : i32
    return %arg1, %c0_i32, %c0_i32_0 : i32, i32, i32
  }
  func.func @transform_5(%arg0: i32, %arg1: i32) -> (i32, i32, i32) {
    %c0_i32 = arith.constant 0 : i32
    %c0_i32_0 = arith.constant 0 : i32
    %c0_i32_1 = arith.constant 0 : i32
    return %arg1, %c0_i32, %c0_i32_0 : i32, i32, i32
  }
  func.func @transform_6(%arg0: i32, %arg1: i32) -> (i32, i32, i32) {
    %c0_i32 = arith.constant 0 : i32
    %c0_i32_0 = arith.constant 0 : i32
    %c0_i32_1 = arith.constant 0 : i32
    return %arg1, %c0_i32, %c0_i32_0 : i32, i32, i32
  }
  func.func @transform_7(%arg0: i32, %arg1: i32) -> (i32, i32, i32) {
    %c0_i32 = arith.constant 0 : i32
    %c0_i32_0 = arith.constant 0 : i32
    %c0_i32_1 = arith.constant 0 : i32
    return %arg1, %c0_i32, %c0_i32_0 : i32, i32, i32
  }
  func.func @transform_8(%arg0: i32, %arg1: i32) -> (i32, i32, i32) {
    %c0_i32 = arith.constant 0 : i32
    %c0_i32_0 = arith.constant 0 : i32
    %c0_i32_1 = arith.constant 0 : i32
    return %arg1, %c0_i32, %c0_i32_0 : i32, i32, i32
  }
  func.func @transform_9(%arg0: i32, %arg1: i32) -> (i32, i32, i32) {
    %c0_i32 = arith.constant 0 : i32
    %c0_i32_0 = arith.constant 0 : i32
    %c0_i32_1 = arith.constant 0 : i32
    return %arg1, %c0_i32, %c0_i32_0 : i32, i32, i32
  }
  func.func @transform_10(%arg0: i32, %arg1: i32) -> (i32, i32, i32) {
    %c0_i32 = arith.constant 0 : i32
    %c0_i32_0 = arith.constant 0 : i32
    %c0_i32_1 = arith.constant 0 : i32
    return %arg1, %c0_i32, %c0_i32_0 : i32, i32, i32
  }
  func.func @transform_11(%arg0: i32, %arg1: i32) -> (i32, i32, i32) {
    %c0_i32 = arith.constant 0 : i32
    %c0_i32_0 = arith.constant 0 : i32
    %c0_i32_1 = arith.constant 0 : i32
    return %arg1, %c0_i32, %c0_i32_0 : i32, i32, i32
  }
  func.func @transform_12(%arg0: i32, %arg1: i32) -> (i32, i32, i32) {
    %c0_i32 = arith.constant 0 : i32
    %c0_i32_0 = arith.constant 0 : i32
    %c0_i32_1 = arith.constant 0 : i32
    return %arg1, %c0_i32, %c0_i32_0 : i32, i32, i32
  }
  func.func @transform_13(%arg0: i32, %arg1: i32) -> (i32, i32, i32) {
    %c0_i32 = arith.constant 0 : i32
    %c0_i32_0 = arith.constant 0 : i32
    %c0_i32_1 = arith.constant 0 : i32
    return %arg1, %c0_i32, %c0_i32_0 : i32, i32, i32
  }
  func.func @transform_14(%arg0: i32, %arg1: i32) -> (i32, i32) {
    %c0_i32 = arith.constant 0 : i32
    %c0_i32_0 = arith.constant 0 : i32
    %c0_i32_1 = arith.constant 0 : i32
    return %c0_i32, %c0_i32_0 : i32, i32
  }
  func.func @transform_15(%arg0: i32, %arg1: i32) -> (i32, i32) {
    %c0_i32 = arith.constant 0 : i32
    %c0_i32_0 = arith.constant 0 : i32
    %c0_i32_1 = arith.constant 0 : i32
    return %c0_i32, %c0_i32_0 : i32, i32
  }
  func.func @transform_16(%arg0: i32, %arg1: i32) -> (i32, i32, i32) {
    %c0_i32 = arith.constant 0 : i32
    %c0_i32_0 = arith.constant 0 : i32
    %c0_i32_1 = arith.constant 0 : i32
    return %arg0, %c0_i32, %c0_i32_0 : i32, i32, i32
  }
}

</mosaic_0001>

<llo_original>
// kernel: tpu_custom_call.1
$region0: #{tpu_custom_call.1}
  #allocation0 [shape = 'u32[]', space=smem, size = 0x4, offset = 0x4, fixed_abs, tag = 'smem constant byte address 0x4 - core index']
  #allocation1 [shape = 'u32[72,128]{1,0:T(1,128)}', space=vmem, size = 0x9000, scoped, tag = 'internal scratch']
  %s0 = inlined_call_operand.hbm [shape: f32[2,8,32], index: 0, kind: input, shape index: {}]
  %s1 = inlined_call_operand.hbm [shape: f32[2,1,8], index: 1, kind: input, shape index: {}]
  %s2 = inlined_call_operand.vmem [shape: bf16[2,32,96], index: 2, kind: input, shape index: {}]
  %s3 = inlined_call_operand.hbm [shape: f32[2,1,96], index: 3, kind: input, shape index: {}]
  %s4 = inlined_call_operand.vmem [shape: bf16[2,32,32], index: 4, kind: input, shape index: {}]
  %s5 = inlined_call_operand.vmem [shape: f32[2,1,32], index: 5, kind: input, shape index: {}]
  %s6 = inlined_call_operand.vmem [shape: f32[2,1,32], index: 6, kind: input, shape index: {}]
  %s7 = inlined_call_operand.hbm [shape: f32[2,1,32], index: 7, kind: input, shape index: {}]
  %s8 = inlined_call_operand.vmem [shape: bf16[2,32,64], index: 8, kind: input, shape index: {}]
  %s9 = inlined_call_operand.vmem [shape: f32[2,1,64], index: 9, kind: input, shape index: {}]
  %s10 = inlined_call_operand.vmem [shape: bf16[2,64,32], index: 10, kind: input, shape index: {}]
  %s11 = inlined_call_operand.vmem [shape: f32[2,1,32], index: 11, kind: input, shape index: {}]
  %s12 = inlined_call_operand.vmem [shape: f32[2,1,32], index: 12, kind: input, shape index: {}]
  %s13 = inlined_call_operand.hbm [shape: f32[2,1,32], index: 13, kind: input, shape index: {}]
  %s14 = inlined_call_operand.vmem [shape: f32[1,32], index: 14, kind: input, shape index: {}]
  %s15 = inlined_call_operand.vmem [shape: f32[1,32], index: 15, kind: input, shape index: {}]
  %s16 = inlined_call_operand.hbm [shape: f32[2,8,32], index: 16, kind: output, shape index: {}]
  %s17 = sld [smem:[#allocation0]]
  $region129: #{tpu_custom_call.1} parent=0
    _
  %s19 = ssub.s32 1, %s17
  %s20 = scalar_select 0, %s19, %s17
  $region1: #{tpu_custom_call.1} parent=0
    #allocation2 [shape = 'u8[8192]{0}', space=vmem, size = 0x2000, scoped, tag = 'input window, operand 0, single buffered']
    #allocation3 [shape = 's32[2]{0}', space=sflag, size = 0x8, scoped, tag = 'scoped memory for tpu_custom_call.1']
    #allocation4 [shape = 's32[2]{0}', space=sflag, size = 0x8, scoped, tag = 'scoped memory for tpu_custom_call.1']
    #allocation5 [shape = 'u8[1024]{0}', space=vmem, size = 0x400, scoped, tag = 'input window, operand 1, single buffered']
    #allocation6 [shape = 's32[1]{0}', space=sflag, size = 0x4, scoped, tag = 'scoped memory for tpu_custom_call.1']
    #allocation7 [shape = 'u8[1024]{0}', space=vmem, size = 0x400, scoped, tag = 'input window, operand 3']
    #allocation8 [shape = 'u8[1024]{0}', space=vmem, size = 0x400, scoped, tag = 'input window, operand 7']
    #allocation9 [shape = 'u8[1024]{0}', space=vmem, size = 0x400, scoped, tag = 'input window, operand 13']
    #allocation10 [shape = 'u8[8192]{0}', space=vmem, size = 0x2000, scoped, tag = 'output window, operand 0, single buffered']
    %21 = vsyncpa [#allocation3], 0
    %22 = vsyncpa [#allocation6], 0
    %23 = vsyncpa [#allocation4], 0
    loop: start=0, step=1, limit=4
    $region2: #{tpu_custom_call.1} parent=1 // loop_pre_header
      _
    $region3: #{tpu_custom_call.1} parent=1 // loop_header
      %s25 = sphi 0, %s29
      %p26 = scmp.ge.s32.totalorder %s25, 4
      %s32 = sphi 0, %s44
      %s33 = sphi 0, %s40
      %s34 = sphi 0, %s32
      %s35 = sphi 0, %s33
      %s36 = sphi 0, %s34
      %s37 = sphi 0, %s35
      %s47 = sphi 0, %s49
      %s50 = sphi 0, %s47
      %s51 = sphi 0, %s50
      %s67 = sphi 0, %s51
      %s73 = sphi 0, %s75
      %s76 = sphi 0, %s73
      %s77 = sphi 0, %s76
      %s93 = sphi 0, %s77
      %s99 = sphi 0, %s101
      %s102 = sphi 0, %s99
      %s103 = sphi 0, %s102
      %s119 = sphi 0, %s103
      %s125 = sphi 0, %s127
      %s128 = sphi 0, %s125
      %s129 = sphi 0, %s128
      %s145 = sphi 0, %s129
      %s151 = sphi 0, %s153
      %s154 = sphi 0, %s151
      %s155 = sphi 0, %s154
      %s171 = sphi 0, %s155
      %s177 = sphi 0, %s179
      %s180 = sphi 0, %s177
      %s181 = sphi 0, %s180
      %s197 = sphi 0, %s181
      %s203 = sphi 0, %s205
      %s206 = sphi 0, %s203
      %s207 = sphi 0, %s206
      %s223 = sphi 0, %s207
      %s229 = sphi 0, %s231
      %s232 = sphi 0, %s229
      %s233 = sphi 0, %s232
      %s249 = sphi 0, %s233
      %s255 = sphi 0, %s257
      %s258 = sphi 0, %s255
      %s259 = sphi 0, %s258
      %s275 = sphi 0, %s259
      %s281 = sphi 0, %s283
      %s284 = sphi 0, %s281
      %s285 = sphi 0, %s284
      %s301 = sphi 0, %s285
      %s307 = sphi 0, %s309
      %s310 = sphi 0, %s307
      %s311 = sphi 0, %s310
      %s327 = sphi 0, %s311
      %s333 = sphi 0, %s335
      %s336 = sphi 0, %s333
      %s337 = sphi 0, %s336
      %s353 = sphi 0, %s337
      %s359 = sphi 0, %s361
      %s362 = sphi 0, %s359
      %s363 = sphi 0, %s362
      %s379 = sphi 0, %s363
      %s385 = sphi 0, %s387
      %s388 = sphi 0, %s385
      %s389 = sphi 0, %s388
      %s405 = sphi 0, %s389
      %s409 = sphi 0, %s409
      %s411 = sphi 0, %s409
      %s412 = sphi 0, %s411
      %s426 = sphi 0, %s412
      %s430 = sphi 0, %s430
      %s432 = sphi 0, %s430
      %s433 = sphi 0, %s432
      %s447 = sphi 0, %s433
      %s453 = sphi 0, %s455
      %s456 = sphi 0, %s453
      %s457 = sphi 0, %s456
      %s473 = sphi 0, %s457
    $region4: #{tpu_custom_call.1} parent=1 // loop_header_branch
      %28 = sbr.rel (%p26) target = $region8
    $region5: #{tpu_custom_call.1} parent=1 // loop_body
      %s30 = ssub.s32 %s25, 1
      %s31 = ssub.s32 %s25, 2
      %s38 = sadd.s32 1, %s33
      %p39 = scmp.ge.s32.totalorder %s38, 2
      %s40 = scalar_select %p39, 0, %s38
      %s41 = sadd.s32 1, %s32
      %s42 = scalar_select %p39, %s41, %s32
      %p43 = scmp.ge.s32.totalorder %s42, 1
      %s44 = scalar_select %p43, 0, %s42
      %s45 = ssub.s32 %s32, %s44
      %p46 = scmp.eq.s32.totalorder %s45, 0
      %s48 = sadd.s32 %s47, 1
      %s49 = scalar_select %p46, %s47, %s48
      %p52 = pneg %p46
      %p53 = scmp.eq.s32.totalorder %s25, 1
      %p54 = por %p52, %p53
      %p55 = scmp.ne.s32.totalorder %s47, %s50
      %p56 = scmp.eq.s32.totalorder %s25, 0
      %p57 = por %p55, %p56
      %p58 = scmp.ne.s32.totalorder %s47, %s50
      %p59 = scmp.eq.s32.totalorder %s30, 1
      %p60 = por %p58, %p59
      %p61 = scmp.ne.s32.totalorder %s50, %s51
      %p62 = scmp.eq.s32.totalorder %s30, 0
      %p63 = por %p61, %p62
      %p64 = scmp.ne.s32.totalorder %s50, %s51
      %p65 = scmp.eq.s32.totalorder %s31, 1
      %p66 = por %p64, %p65
      %p68 = scmp.ne.s32.totalorder %s51, %s67
      %p69 = scmp.eq.s32.totalorder %s31, 0
      %p70 = por %p68, %p69
      %s71 = ssub.s32 %s32, %s44
      %p72 = scmp.eq.s32.totalorder %s71, 0
      %s74 = sadd.s32 %s73, 1
      %s75 = scalar_select %p72, %s73, %s74
      %p78 = pneg %p72
      %p79 = scmp.eq.s32.totalorder %s25, 1
      %p80 = por %p78, %p79
      %p81 = scmp.ne.s32.totalorder %s73, %s76
      %p82 = scmp.eq.s32.totalorder %s25, 0
      %p83 = por %p81, %p82
      %p84 = scmp.ne.s32.totalorder %s73, %s76
      %p85 = scmp.eq.s32.totalorder %s30, 1
      %p86 = por %p84, %p85
      %p87 = scmp.ne.s32.totalorder %s76, %s77
      %p88 = scmp.eq.s32.totalorder %s30, 0
      %p89 = por %p87, %p88
      %p90 = scmp.ne.s32.totalorder %s76, %s77
      %p91 = scmp.eq.s32.totalorder %s31, 1
      %p92 = por %p90, %p91
      %p94 = scmp.ne.s32.totalorder %s77, %s93
      %p95 = scmp.eq.s32.totalorder %s31, 0
      %p96 = por %p94, %p95
      %s97 = ssub.s32 %s33, %s40
      %p98 = scmp.eq.s32.totalorder %s97, 0
      %s100 = sadd.s32 %s99, 1
      %s101 = scalar_select %p98, %s99, %s100
      %p104 = pneg %p98
      %p105 = scmp.eq.s32.totalorder %s25, 1
      %p106 = por %p104, %p105
      %p107 = scmp.ne.s32.totalorder %s99, %s102
      %p108 = scmp.eq.s32.totalorder %s25, 0
      %p109 = por %p107, %p108
      %p110 = scmp.ne.s32.totalorder %s99, %s102
      %p111 = scmp.eq.s32.totalorder %s30, 1
      %p112 = por %p110, %p111
      %p113 = scmp.ne.s32.totalorder %s102, %s103
      %p114 = scmp.eq.s32.totalorder %s30, 0
      %p115 = por %p113, %p114
      %p116 = scmp.ne.s32.totalorder %s102, %s103
      %p117 = scmp.eq.s32.totalorder %s31, 1
      %p118 = por %p116, %p117
      %p120 = scmp.ne.s32.totalorder %s103, %s119
      %p121 = scmp.eq.s32.totalorder %s31, 0
      %p122 = por %p120, %p121
      %s123 = ssub.s32 %s33, %s40
      %p124 = scmp.eq.s32.totalorder %s123, 0
      %s126 = sadd.s32 %s125, 1
      %s127 = scalar_select %p124, %s125, %s126
      %p130 = pneg %p124
      %p131 = scmp.eq.s32.totalorder %s25, 1
      %p132 = por %p130, %p131
      %p133 = scmp.ne.s32.totalorder %s125, %s128
      %p134 = scmp.eq.s32.totalorder %s25, 0
      %p135 = por %p133, %p134
      %p136 = scmp.ne.s32.totalorder %s125, %s128
      %p137 = scmp.eq.s32.totalorder %s30, 1
      %p138 = por %p136, %p137
      %p139 = scmp.ne.s32.totalorder %s128, %s129
      %p140 = scmp.eq.s32.totalorder %s30, 0
      %p141 = por %p139, %p140
      %p142 = scmp.ne.s32.totalorder %s128, %s129
      %p143 = scmp.eq.s32.totalorder %s31, 1
      %p144 = por %p142, %p143
      %p146 = scmp.ne.s32.totalorder %s129, %s145
      %p147 = scmp.eq.s32.totalorder %s31, 0
      %p148 = por %p146, %p147
      %s149 = ssub.s32 %s33, %s40
      %p150 = scmp.eq.s32.totalorder %s149, 0
      %s152 = sadd.s32 %s151, 1
      %s153 = scalar_select %p150, %s151, %s152
      %p156 = pneg %p150
      %p157 = scmp.eq.s32.totalorder %s25, 1
      %p158 = por %p156, %p157
      %p159 = scmp.ne.s32.totalorder %s151, %s154
      %p160 = scmp.eq.s32.totalorder %s25, 0
      %p161 = por %p159, %p160
      %p162 = scmp.ne.s32.totalorder %s151, %s154
      %p163 = scmp.eq.s32.totalorder %s30, 1
      %p164 = por %p162, %p163
      %p165 = scmp.ne.s32.totalorder %s154, %s155
      %p166 = scmp.eq.s32.totalorder %s30, 0
      %p167 = por %p165, %p166
      %p168 = scmp.ne.s32.totalorder %s154, %s155
      %p169 = scmp.eq.s32.totalorder %s31, 1
      %p170 = por %p168, %p169
      %p172 = scmp.ne.s32.totalorder %s155, %s171
      %p173 = scmp.eq.s32.totalorder %s31, 0
      %p174 = por %p172, %p173
      %s175 = ssub.s32 %s33, %s40
      %p176 = scmp.eq.s32.totalorder %s175, 0
      %s178 = sadd.s32 %s177, 1
      %s179 = scalar_select %p176, %s177, %s178
      %p182 = pneg %p176
      %p183 = scmp.eq.s32.totalorder %s25, 1
      %p184 = por %p182, %p183
      %p185 = scmp.ne.s32.totalorder %s177, %s180
      %p186 = scmp.eq.s32.totalorder %s25, 0
      %p187 = por %p185, %p186
      %p188 = scmp.ne.s32.totalorder %s177, %s180
      %p189 = scmp.eq.s32.totalorder %s30, 1
      %p190 = por %p188, %p189
      %p191 = scmp.ne.s32.totalorder %s180, %s181
      %p192 = scmp.eq.s32.totalorder %s30, 0
      %p193 = por %p191, %p192
      %p194 = scmp.ne.s32.totalorder %s180, %s181
      %p195 = scmp.eq.s32.totalorder %s31, 1
      %p196 = por %p194, %p195
      %p198 = scmp.ne.s32.totalorder %s181, %s197
      %p199 = scmp.eq.s32.totalorder %s31, 0
      %p200 = por %p198, %p199
      %s201 = ssub.s32 %s33, %s40
      %p202 = scmp.eq.s32.totalorder %s201, 0
      %s204 = sadd.s32 %s203, 1
      %s205 = scalar_select %p202, %s203, %s204
      %p208 = pneg %p202
      %p209 = scmp.eq.s32.totalorder %s25, 1
      %p210 = por %p208, %p209
      %p211 = scmp.ne.s32.totalorder %s203, %s206
      %p212 = scmp.eq.s32.totalorder %s25, 0
      %p213 = por %p211, %p212
      %p214 = scmp.ne.s32.totalorder %s203, %s206
      %p215 = scmp.eq.s32.totalorder %s30, 1
      %p216 = por %p214, %p215
      %p217 = scmp.ne.s32.totalorder %s206, %s207
      %p218 = scmp.eq.s32.totalorder %s30, 0
      %p219 = por %p217, %p218
      %p220 = scmp.ne.s32.totalorder %s206, %s207
      %p221 = scmp.eq.s32.totalorder %s31, 1
      %p222 = por %p220, %p221
      %p224 = scmp.ne.s32.totalorder %s207, %s223
      %p225 = scmp.eq.s32.totalorder %s31, 0
      %p226 = por %p224, %p225
      %s227 = ssub.s32 %s33, %s40
      %p228 = scmp.eq.s32.totalorder %s227, 0
      %s230 = sadd.s32 %s229, 1
      %s231 = scalar_select %p228, %s229, %s230
      %p234 = pneg %p228
      %p235 = scmp.eq.s32.totalorder %s25, 1
      %p236 = por %p234, %p235
      %p237 = scmp.ne.s32.totalorder %s229, %s232
      %p238 = scmp.eq.s32.totalorder %s25, 0
      %p239 = por %p237, %p238
      %p240 = scmp.ne.s32.totalorder %s229, %s232
      %p241 = scmp.eq.s32.totalorder %s30, 1
      %p242 = por %p240, %p241
      %p243 = scmp.ne.s32.totalorder %s232, %s233
      %p244 = scmp.eq.s32.totalorder %s30, 0
      %p245 = por %p243, %p244
      %p246 = scmp.ne.s32.totalorder %s232, %s233
      %p247 = scmp.eq.s32.totalorder %s31, 1
      %p248 = por %p246, %p247
      %p250 = scmp.ne.s32.totalorder %s233, %s249
      %p251 = scmp.eq.s32.totalorder %s31, 0
      %p252 = por %p250, %p251
      %s253 = ssub.s32 %s33, %s40
      %p254 = scmp.eq.s32.totalorder %s253, 0
      %s256 = sadd.s32 %s255, 1
      %s257 = scalar_select %p254, %s255, %s256
      %p260 = pneg %p254
      %p261 = scmp.eq.s32.totalorder %s25, 1
      %p262 = por %p260, %p261
      %p263 = scmp.ne.s32.totalorder %s255, %s258
      %p264 = scmp.eq.s32.totalorder %s25, 0
      %p265 = por %p263, %p264
      %p266 = scmp.ne.s32.totalorder %s255, %s258
      %p267 = scmp.eq.s32.totalorder %s30, 1
      %p268 = por %p266, %p267
      %p269 = scmp.ne.s32.totalorder %s258, %s259
      %p270 = scmp.eq.s32.totalorder %s30, 0
      %p271 = por %p269, %p270
      %p272 = scmp.ne.s32.totalorder %s258, %s259
      %p273 = scmp.eq.s32.totalorder %s31, 1
      %p274 = por %p272, %p273
      %p276 = scmp.ne.s32.totalorder %s259, %s275
      %p277 = scmp.eq.s32.totalorder %s31, 0
      %p278 = por %p276, %p277
      %s279 = ssub.s32 %s33, %s40
      %p280 = scmp.eq.s32.totalorder %s279, 0
      %s282 = sadd.s32 %s281, 1
      %s283 = scalar_select %p280, %s281, %s282
      %p286 = pneg %p280
      %p287 = scmp.eq.s32.totalorder %s25, 1
      %p288 = por %p286, %p287
      %p289 = scmp.ne.s32.totalorder %s281, %s284
      %p290 = scmp.eq.s32.totalorder %s25, 0
      %p291 = por %p289, %p290
      %p292 = scmp.ne.s32.totalorder %s281, %s284
      %p293 = scmp.eq.s32.totalorder %s30, 1
      %p294 = por %p292, %p293
      %p295 = scmp.ne.s32.totalorder %s284, %s285
      %p296 = scmp.eq.s32.totalorder %s30, 0
      %p297 = por %p295, %p296
      %p298 = scmp.ne.s32.totalorder %s284, %s285
      %p299 = scmp.eq.s32.totalorder %s31, 1
      %p300 = por %p298, %p299
      %p302 = scmp.ne.s32.totalorder %s285, %s301
      %p303 = scmp.eq.s32.totalorder %s31, 0
      %p304 = por %p302, %p303
      %s305 = ssub.s32 %s33, %s40
      %p306 = scmp.eq.s32.totalorder %s305, 0
      %s308 = sadd.s32 %s307, 1
      %s309 = scalar_select %p306, %s307, %s308
      %p312 = pneg %p306
      %p313 = scmp.eq.s32.totalorder %s25, 1
      %p314 = por %p312, %p313
      %p315 = scmp.ne.s32.totalorder %s307, %s310
      %p316 = scmp.eq.s32.totalorder %s25, 0
      %p317 = por %p315, %p316
      %p318 = scmp.ne.s32.totalorder %s307, %s310
      %p319 = scmp.eq.s32.totalorder %s30, 1
      %p320 = por %p318, %p319
      %p321 = scmp.ne.s32.totalorder %s310, %s311
      %p322 = scmp.eq.s32.totalorder %s30, 0
      %p323 = por %p321, %p322
      %p324 = scmp.ne.s32.totalorder %s310, %s311
      %p325 = scmp.eq.s32.totalorder %s31, 1
      %p326 = por %p324, %p325
      %p328 = scmp.ne.s32.totalorder %s311, %s327
      %p329 = scmp.eq.s32.totalorder %s31, 0
      %p330 = por %p328, %p329
      %s331 = ssub.s32 %s33, %s40
      %p332 = scmp.eq.s32.totalorder %s331, 0
      %s334 = sadd.s32 %s333, 1
      %s335 = scalar_select %p332, %s333, %s334
      %p338 = pneg %p332
      %p339 = scmp.eq.s32.totalorder %s25, 1
      %p340 = por %p338, %p339
      %p341 = scmp.ne.s32.totalorder %s333, %s336
      %p342 = scmp.eq.s32.totalorder %s25, 0
      %p343 = por %p341, %p342
      %p344 = scmp.ne.s32.totalorder %s333, %s336
      %p345 = scmp.eq.s32.totalorder %s30, 1
      %p346 = por %p344, %p345
      %p347 = scmp.ne.s32.totalorder %s336, %s337
      %p348 = scmp.eq.s32.totalorder %s30, 0
      %p349 = por %p347, %p348
      %p350 = scmp.ne.s32.totalorder %s336, %s337
      %p351 = scmp.eq.s32.totalorder %s31, 1
      %p352 = por %p350, %p351
      %p354 = scmp.ne.s32.totalorder %s337, %s353
      %p355 = scmp.eq.s32.totalorder %s31, 0
      %p356 = por %p354, %p355
      %s357 = ssub.s32 %s33, %s40
      %p358 = scmp.eq.s32.totalorder %s357, 0
      %s360 = sadd.s32 %s359, 1
      %s361 = scalar_select %p358, %s359, %s360
      %p364 = pneg %p358
      %p365 = scmp.eq.s32.totalorder %s25, 1
      %p366 = por %p364, %p365
      %p367 = scmp.ne.s32.totalorder %s359, %s362
      %p368 = scmp.eq.s32.totalorder %s25, 0
      %p369 = por %p367, %p368
      %p370 = scmp.ne.s32.totalorder %s359, %s362
      %p371 = scmp.eq.s32.totalorder %s30, 1
      %p372 = por %p370, %p371
      %p373 = scmp.ne.s32.totalorder %s362, %s363
      %p374 = scmp.eq.s32.totalorder %s30, 0
      %p375 = por %p373, %p374
      %p376 = scmp.ne.s32.totalorder %s362, %s363
      %p377 = scmp.eq.s32.totalorder %s31, 1
      %p378 = por %p376, %p377
      %p380 = scmp.ne.s32.totalorder %s363, %s379
      %p381 = scmp.eq.s32.totalorder %s31, 0
      %p382 = por %p380, %p381
      %s383 = ssub.s32 %s33, %s40
      %p384 = scmp.eq.s32.totalorder %s383, 0
      %s386 = sadd.s32 %s385, 1
      %s387 = scalar_select %p384, %s385, %s386
      %p390 = pneg %p384
      %p391 = scmp.eq.s32.totalorder %s25, 1
      %p392 = por %p390, %p391
      %p393 = scmp.ne.s32.totalorder %s385, %s388
      %p394 = scmp.eq.s32.totalorder %s25, 0
      %p395 = por %p393, %p394
      %p396 = scmp.ne.s32.totalorder %s385, %s388
      %p397 = scmp.eq.s32.totalorder %s30, 1
      %p398 = por %p396, %p397
      %p399 = scmp.ne.s32.totalorder %s388, %s389
      %p400 = scmp.eq.s32.totalorder %s30, 0
      %p401 = por %p399, %p400
      %p402 = scmp.ne.s32.totalorder %s388, %s389
      %p403 = scmp.eq.s32.totalorder %s31, 1
      %p404 = por %p402, %p403
      %p406 = scmp.ne.s32.totalorder %s389, %s405
      %p407 = scmp.eq.s32.totalorder %s31, 0
      %p408 = por %p406, %p407
      %s410 = sadd.s32 %s409, 1
      %p413 = scmp.eq.s32.totalorder %s25, 1
      %p414 = scmp.ne.s32.totalorder %s409, %s411
      %p415 = scmp.eq.s32.totalorder %s25, 0
      %p416 = por %p414, %p415
      %p417 = scmp.ne.s32.totalorder %s409, %s411
      %p418 = scmp.eq.s32.totalorder %s30, 1
      %p419 = por %p417, %p418
      %p420 = scmp.ne.s32.totalorder %s411, %s412
      %p421 = scmp.eq.s32.totalorder %s30, 0
      %p422 = por %p420, %p421
      %p423 = scmp.ne.s32.totalorder %s411, %s412
      %p424 = scmp.eq.s32.totalorder %s31, 1
      %p425 = por %p423, %p424
      %p427 = scmp.ne.s32.totalorder %s412, %s426
      %p428 = scmp.eq.s32.totalorder %s31, 0
      %p429 = por %p427, %p428
      %s431 = sadd.s32 %s430, 1
      %p434 = scmp.eq.s32.totalorder %s25, 1
      %p435 = scmp.ne.s32.totalorder %s430, %s432
      %p436 = scmp.eq.s32.totalorder %s25, 0
      %p437 = por %p435, %p436
      %p438 = scmp.ne.s32.totalorder %s430, %s432
      %p439 = scmp.eq.s32.totalorder %s30, 1
      %p440 = por %p438, %p439
      %p441 = scmp.ne.s32.totalorder %s432, %s433
      %p442 = scmp.eq.s32.totalorder %s30, 0
      %p443 = por %p441, %p442
      %p444 = scmp.ne.s32.totalorder %s432, %s433
      %p445 = scmp.eq.s32.totalorder %s31, 1
      %p446 = por %p444, %p445
      %p448 = scmp.ne.s32.totalorder %s433, %s447
      %p449 = scmp.eq.s32.totalorder %s31, 0
      %p450 = por %p448, %p449
      %s451 = ssub.s32 %s32, %s44
      %p452 = scmp.eq.s32.totalorder %s451, 0
      %s454 = sadd.s32 %s453, 1
      %s455 = scalar_select %p452, %s453, %s454
      %p458 = pneg %p452
      %p459 = scmp.eq.s32.totalorder %s25, 1
      %p460 = por %p458, %p459
      %p461 = scmp.ne.s32.totalorder %s453, %s456
      %p462 = scmp.eq.s32.totalorder %s25, 0
      %p463 = por %p461, %p462
      %p464 = scmp.ne.s32.totalorder %s453, %s456
      %p465 = scmp.eq.s32.totalorder %s30, 1
      %p466 = por %p464, %p465
      %p467 = scmp.ne.s32.totalorder %s456, %s457
      %p468 = scmp.eq.s32.totalorder %s30, 0
      %p469 = por %p467, %p468
      %p470 = scmp.ne.s32.totalorder %s456, %s457
      %p471 = scmp.eq.s32.totalorder %s31, 1
      %p472 = por %p470, %p471
      %p474 = scmp.ne.s32.totalorder %s457, %s473
      %p475 = scmp.eq.s32.totalorder %s31, 0
      %p476 = por %p474, %p475
      %p477 = scmp.le.s32.totalorder 1, %s25
      %p478 = scmp.lt.s32.totalorder %s25, 3
      %p479 = pnand %p477, %p478
      %p480 = pneg %p479
      // Predicated region
      $region9: #{tpu_custom_call.1} parent=5 // pred_check
        _
      $region10: #{tpu_custom_call.1} parent=5 // pred_check_branch
        %482 = sbr.rel (%p479) target = $region12
      $region11: #{tpu_custom_call.1} parent=5 // pred_region
        %s483 = ssub.s32 %s25, 1
        // Predicated region
        $region13: #{tpu_custom_call.1} parent=11 // pred_check
          %p484 = pneg %p63
        $region14: #{tpu_custom_call.1} parent=11 // pred_check_branch
          %486 = sbr.rel (%p484) target = $region16
        $region15: #{tpu_custom_call.1} parent=11 // pred_region
          %s487 = smul.u32 2, %s34
          %489 = vsyncadd [#allocation3], 0
          %s490 = smul.addr %s487, 8
          %s491 = scalar_lea.hbm %s0, %s490
          %s492 = sshll.u32 %s491, 4
          %s493 = int_to_ptr.hbm [resolvable:$true] %s492
          %s494 = sshll.u32 [#allocation2], 4
          %s495 = int_to_ptr.vmem [resolvable:$true] %s494
          %500 = dma.hbm_to_vmem [thread:$0]  %s493, 256, %s495, [#allocation3], 128, 128, 8
        $region16: #{tpu_custom_call.1} parent=11 // pred_fallthru
          _
        // Predicated region
        $region17: #{tpu_custom_call.1} parent=11 // pred_check
          %p501 = pneg %p89
        $region18: #{tpu_custom_call.1} parent=11 // pred_check_branch
          %503 = sbr.rel (%p501) target = $region20
        $region19: #{tpu_custom_call.1} parent=11 // pred_region
          %s504 = smul.u32 2, %s34
          %506 = vsyncadd [#allocation6], 0
          %s507 = scalar_lea.hbm %s1, %s504
          %s508 = sshll.u32 %s507, 4
          %s509 = int_to_ptr.hbm [resolvable:$true] %s508
          %s510 = sshll.u32 [#allocation5], 4
          %s511 = int_to_ptr.vmem [resolvable:$true] %s510
          %516 = dma.hbm_to_vmem [thread:$0]  %s509, 32, %s511, [#allocation6], 16, 16, 1
        $region20: #{tpu_custom_call.1} parent=11 // pred_fallthru
          _
        // Predicated region
        $region21: #{tpu_custom_call.1} parent=11 // pred_check
          %p517 = pneg %p422
        $region22: #{tpu_custom_call.1} parent=11 // pred_check_branch
          %519 = sbr.rel (%p517) target = $region24
        $region23: #{tpu_custom_call.1} parent=11 // pred_region
          _
        $region24: #{tpu_custom_call.1} parent=11 // pred_fallthru
          _
        // Predicated region
        $region25: #{tpu_custom_call.1} parent=11 // pred_check
          %p520 = pneg %p443
        $region26: #{tpu_custom_call.1} parent=11 // pred_check_branch
          %522 = sbr.rel (%p520) target = $region28
        $region27: #{tpu_custom_call.1} parent=11 // pred_region
          _
        $region28: #{tpu_custom_call.1} parent=11 // pred_fallthru
          _
      $region12: #{tpu_custom_call.1} parent=5 // pred_fallthru
        _
      %p523 = scmp.lt.s32.totalorder %s25, 2
      // Predicated region
      $region29: #{tpu_custom_call.1} parent=5 // pred_check
        %p524 = pneg %p523
      $region30: #{tpu_custom_call.1} parent=5 // pred_check_branch
        %526 = sbr.rel (%p524) target = $region32
      $region31: #{tpu_custom_call.1} parent=5 // pred_region
        // Predicated region
        $region33: #{tpu_custom_call.1} parent=31 // pred_check
          %p527 = pneg %p109
        $region34: #{tpu_custom_call.1} parent=31 // pred_check_branch
          %529 = sbr.rel (%p527) target = $region36
        $region35: #{tpu_custom_call.1} parent=31 // pred_region
          %p530 = scmp.lt.s32.totalorder %s33, 1
          %s531 = scalar_select %p530, %s33, 1
          %s532 = smul.addr %s531, 4
          %s533 = smul.addr %s532, 4
          %s534 = scalar_lea.vmem %s2, %s533
        $region36: #{tpu_custom_call.1} parent=31 // pred_fallthru
          _
        // Predicated region
        $region37: #{tpu_custom_call.1} parent=31 // pred_check
          %p535 = pneg %p135
        $region38: #{tpu_custom_call.1} parent=31 // pred_check_branch
          %537 = sbr.rel (%p535) target = $region40
        $region39: #{tpu_custom_call.1} parent=31 // pred_region
          %s538 = sand.u32 %s25, 1
          %s539 = scalar_lea.sflag [#allocation3], %s538
          %s540 = sand.u32 %s125, 1
          %s541 = scalar_lea.vmem [#allocation7], %s540
          %543 = vsyncadd %s539, 0
          %s544 = scalar_lea.hbm %s3, %s33
          %s546 = sshll.u32 %s544, 4
          %s547 = int_to_ptr.hbm [resolvable:$true] %s546
          %s548 = sshll.u32 %s541, 4
          %s549 = int_to_ptr.vmem [resolvable:$true] %s548
          %551 = dma.hbm_to_vmem [thread:$0]  %s547, 16, %s549, %s539
        $region40: #{tpu_custom_call.1} parent=31 // pred_fallthru
          _
        // Predicated region
        $region41: #{tpu_custom_call.1} parent=31 // pred_check
          %p552 = pneg %p161
        $region42: #{tpu_custom_call.1} parent=31 // pred_check_branch
          %554 = sbr.rel (%p552) target = $region44
        $region43: #{tpu_custom_call.1} parent=31 // pred_region
          %p555 = scmp.lt.s32.totalorder %s33, 1
          %s556 = scalar_select %p555, %s33, 1
          %s557 = smul.addr %s556, 4
          %s558 = smul.addr %s557, 4
          %s559 = scalar_lea.vmem %s4, %s558
        $region44: #{tpu_custom_call.1} parent=31 // pred_fallthru
          _
        // Predicated region
        $region45: #{tpu_custom_call.1} parent=31 // pred_check
          %p560 = pneg %p187
        $region46: #{tpu_custom_call.1} parent=31 // pred_check_branch
          %562 = sbr.rel (%p560) target = $region48
        $region47: #{tpu_custom_call.1} parent=31 // pred_region
          %p563 = scmp.lt.s32.totalorder %s33, 1
          %s564 = scalar_select %p563, %s33, 1
          %s565 = scalar_lea.vmem %s5, %s564
        $region48: #{tpu_custom_call.1} parent=31 // pred_fallthru
          _
        // Predicated region
        $region49: #{tpu_custom_call.1} parent=31 // pred_check
          %p566 = pneg %p213
        $region50: #{tpu_custom_call.1} parent=31 // pred_check_branch
          %568 = sbr.rel (%p566) target = $region52
        $region51: #{tpu_custom_call.1} parent=31 // pred_region
          %p569 = scmp.lt.s32.totalorder %s33, 1
          %s570 = scalar_select %p569, %s33, 1
          %s571 = scalar_lea.vmem %s6, %s570
        $region52: #{tpu_custom_call.1} parent=31 // pred_fallthru
          _
        // Predicated region
        $region53: #{tpu_custom_call.1} parent=31 // pred_check
          %p572 = pneg %p239
        $region54: #{tpu_custom_call.1} parent=31 // pred_check_branch
          %574 = sbr.rel (%p572) target = $region56
        $region55: #{tpu_custom_call.1} parent=31 // pred_region
          %s575 = sand.u32 %s25, 1
          %s576 = scalar_lea.sflag [#allocation3], %s575
          %s577 = sand.u32 %s229, 1
          %s578 = scalar_lea.vmem [#allocation8], %s577
          %580 = vsyncadd %s576, 0
          %s581 = scalar_lea.hbm %s7, %s33
          %s583 = sshll.u32 %s581, 4
          %s584 = int_to_ptr.hbm [resolvable:$true] %s583
          %s585 = sshll.u32 %s578, 4
          %s586 = int_to_ptr.vmem [resolvable:$true] %s585
          %588 = dma.hbm_to_vmem [thread:$0]  %s584, 16, %s586, %s576
        $region56: #{tpu_custom_call.1} parent=31 // pred_fallthru
          _
        // Predicated region
        $region57: #{tpu_custom_call.1} parent=31 // pred_check
          %p589 = pneg %p265
        $region58: #{tpu_custom_call.1} parent=31 // pred_check_branch
          %591 = sbr.rel (%p589) target = $region60
        $region59: #{tpu_custom_call.1} parent=31 // pred_region
          %p592 = scmp.lt.s32.totalorder %s33, 1
          %s593 = scalar_select %p592, %s33, 1
          %s594 = smul.addr %s593, 4
          %s595 = smul.addr %s594, 4
          %s596 = scalar_lea.vmem %s8, %s595
        $region60: #{tpu_custom_call.1} parent=31 // pred_fallthru
          _
        // Predicated region
        $region61: #{tpu_custom_call.1} parent=31 // pred_check
          %p597 = pneg %p291
        $region62: #{tpu_custom_call.1} parent=31 // pred_check_branch
          %599 = sbr.rel (%p597) target = $region64
        $region63: #{tpu_custom_call.1} parent=31 // pred_region
          %p600 = scmp.lt.s32.totalorder %s33, 1
          %s601 = scalar_select %p600, %s33, 1
          %s602 = scalar_lea.vmem %s9, %s601
        $region64: #{tpu_custom_call.1} parent=31 // pred_fallthru
          _
        // Predicated region
        $region65: #{tpu_custom_call.1} parent=31 // pred_check
          %p603 = pneg %p317
        $region66: #{tpu_custom_call.1} parent=31 // pred_check_branch
          %605 = sbr.rel (%p603) target = $region68
        $region67: #{tpu_custom_call.1} parent=31 // pred_region
          %p606 = scmp.lt.s32.totalorder %s33, 1
          %s607 = scalar_select %p606, %s33, 1
          %s608 = smul.addr %s607, 8
          %s609 = smul.addr %s608, 4
          %s610 = scalar_lea.vmem %s10, %s609
        $region68: #{tpu_custom_call.1} parent=31 // pred_fallthru
          _
        // Predicated region
        $region69: #{tpu_custom_call.1} parent=31 // pred_check
          %p611 = pneg %p343
        $region70: #{tpu_custom_call.1} parent=31 // pred_check_branch
          %613 = sbr.rel (%p611) target = $region72
        $region71: #{tpu_custom_call.1} parent=31 // pred_region
          %p614 = scmp.lt.s32.totalorder %s33, 1
          %s615 = scalar_select %p614, %s33, 1
          %s616 = scalar_lea.vmem %s11, %s615
        $region72: #{tpu_custom_call.1} parent=31 // pred_fallthru
          _
        // Predicated region
        $region73: #{tpu_custom_call.1} parent=31 // pred_check
          %p617 = pneg %p369
        $region74: #{tpu_custom_call.1} parent=31 // pred_check_branch
          %619 = sbr.rel (%p617) target = $region76
        $region75: #{tpu_custom_call.1} parent=31 // pred_region
          %p620 = scmp.lt.s32.totalorder %s33, 1
          %s621 = scalar_select %p620, %s33, 1
          %s622 = scalar_lea.vmem %s12, %s621
        $region76: #{tpu_custom_call.1} parent=31 // pred_fallthru
          _
        // Predicated region
        $region77: #{tpu_custom_call.1} parent=31 // pred_check
          %p623 = pneg %p395
        $region78: #{tpu_custom_call.1} parent=31 // pred_check_branch
          %625 = sbr.rel (%p623) target = $region80
        $region79: #{tpu_custom_call.1} parent=31 // pred_region
          %s626 = sand.u32 %s25, 1
          %s627 = scalar_lea.sflag [#allocation3], %s626
          %s628 = sand.u32 %s385, 1
          %s629 = scalar_lea.vmem [#allocation9], %s628
          %631 = vsyncadd %s627, 0
          %s632 = scalar_lea.hbm %s13, %s33
          %s634 = sshll.u32 %s632, 4
          %s635 = int_to_ptr.hbm [resolvable:$true] %s634
          %s636 = sshll.u32 %s629, 4
          %s637 = int_to_ptr.vmem [resolvable:$true] %s636
          %639 = dma.hbm_to_vmem [thread:$0]  %s635, 16, %s637, %s627
        $region80: #{tpu_custom_call.1} parent=31 // pred_fallthru
          _
      $region32: #{tpu_custom_call.1} parent=5 // pred_fallthru
        _
      %p640 = scmp.le.s32.totalorder 1, %s25
      %p641 = scmp.lt.s32.totalorder %s25, 3
      %p642 = pnand %p640, %p641
      %p643 = pneg %p642
      // Predicated region
      $region81: #{tpu_custom_call.1} parent=5 // pred_check
        _
      $region82: #{tpu_custom_call.1} parent=5 // pred_check_branch
        %645 = sbr.rel (%p642) target = $region84
      $region83: #{tpu_custom_call.1} parent=5 // pred_region
        %s646 = ssub.s32 %s25, 1
        // Predicated region
        $region85: #{tpu_custom_call.1} parent=83 // pred_check
          %p647 = pneg %p63
        $region86: #{tpu_custom_call.1} parent=83 // pred_check_branch
          %649 = sbr.rel (%p647) target = $region88
        $region87: #{tpu_custom_call.1} parent=83 // pred_region
          %651 = dma.done [#allocation3], 256
        $region88: #{tpu_custom_call.1} parent=83 // pred_fallthru
          _
        // Predicated region
        $region89: #{tpu_custom_call.1} parent=83 // pred_check
          %p652 = pneg %p89
        $region90: #{tpu_custom_call.1} parent=83 // pred_check_branch
          %654 = sbr.rel (%p652) target = $region92
        $region91: #{tpu_custom_call.1} parent=83 // pred_region
          %656 = dma.done [#allocation6], 32
        $region92: #{tpu_custom_call.1} parent=83 // pred_fallthru
          _
        %s657 = sand.u32 %s30, 1
        %s658 = scalar_lea.sflag [#allocation3], %s657
        %s659 = sand.u32 %s128, 1
        %s660 = scalar_lea.vmem [#allocation7], %s659
        // Predicated region
        $region93: #{tpu_custom_call.1} parent=83 // pred_check
          %p661 = pneg %p141
        $region94: #{tpu_custom_call.1} parent=83 // pred_check_branch
          %663 = sbr.rel (%p661) target = $region96
        $region95: #{tpu_custom_call.1} parent=83 // pred_region
          %665 = dma.done %s658, 16
        $region96: #{tpu_custom_call.1} parent=83 // pred_fallthru
          _
        %s666 = sand.u32 %s30, 1
        %s667 = scalar_lea.sflag [#allocation3], %s666
        %s668 = sand.u32 %s232, 1
        %s669 = scalar_lea.vmem [#allocation8], %s668
        // Predicated region
        $region97: #{tpu_custom_call.1} parent=83 // pred_check
          %p670 = pneg %p245
        $region98: #{tpu_custom_call.1} parent=83 // pred_check_branch
          %672 = sbr.rel (%p670) target = $region100
        $region99: #{tpu_custom_call.1} parent=83 // pred_region
          %674 = dma.done %s667, 16
        $region100: #{tpu_custom_call.1} parent=83 // pred_fallthru
          _
        %s675 = sand.u32 %s30, 1
        %s676 = scalar_lea.sflag [#allocation3], %s675
        %s677 = sand.u32 %s388, 1
        %s678 = scalar_lea.vmem [#allocation9], %s677
        // Predicated region
        $region101: #{tpu_custom_call.1} parent=83 // pred_check
          %p679 = pneg %p401
        $region102: #{tpu_custom_call.1} parent=83 // pred_check_branch
          %681 = sbr.rel (%p679) target = $region104
        $region103: #{tpu_custom_call.1} parent=83 // pred_region
          %683 = dma.done %s676, 16
        $region104: #{tpu_custom_call.1} parent=83 // pred_fallthru
          _
        %p684 = pneg %p63
        %p685 = pneg %p60
        %p686 = pneg %p89
        %p687 = pneg %p86
        %p688 = scmp.lt.s32.totalorder %s35, 1
        %s689 = scalar_select %p688, %s35, 1
        %s690 = smul.addr %s689, 4
        %s691 = smul.addr %s690, 4
        %s692 = scalar_lea.vmem %s2, %s691
        %p693 = pneg %p115
        %p694 = pneg %p112
        %s695 = sand.u32 %s30, 1
        %s696 = scalar_lea.sflag [#allocation3], %s695
        %s697 = sand.u32 %s128, 1
        %s698 = scalar_lea.vmem [#allocation7], %s697
        %p699 = pneg %p141
        %p700 = pneg %p138
        %p701 = scmp.lt.s32.totalorder %s35, 1
        %s702 = scalar_select %p701, %s35, 1
        %s703 = smul.addr %s702, 4
        %s704 = smul.addr %s703, 4
        %s705 = scalar_lea.vmem %s4, %s704
        %p706 = pneg %p167
        %p707 = pneg %p164
        %p708 = scmp.lt.s32.totalorder %s35, 1
        %s709 = scalar_select %p708, %s35, 1
        %s710 = scalar_lea.vmem %s5, %s709
        %p711 = pneg %p193
        %p712 = pneg %p190
        %p713 = scmp.lt.s32.totalorder %s35, 1
        %s714 = scalar_select %p713, %s35, 1
        %s715 = scalar_lea.vmem %s6, %s714
        %p716 = pneg %p219
        %p717 = pneg %p216
        %s718 = sand.u32 %s30, 1
        %s719 = scalar_lea.sflag [#allocation3], %s718
        %s720 = sand.u32 %s232, 1
        %s721 = scalar_lea.vmem [#allocation8], %s720
        %p722 = pneg %p245
        %p723 = pneg %p242
        %p724 = scmp.lt.s32.totalorder %s35, 1
        %s725 = scalar_select %p724, %s35, 1
        %s726 = smul.addr %s725, 4
        %s727 = smul.addr %s726, 4
        %s728 = scalar_lea.vmem %s8, %s727
        %p729 = pneg %p271
        %p730 = pneg %p268
        %p731 = scmp.lt.s32.totalorder %s35, 1
        %s732 = scalar_select %p731, %s35, 1
        %s733 = scalar_lea.vmem %s9, %s732
        %p734 = pneg %p297
        %p735 = pneg %p294
        %p736 = scmp.lt.s32.totalorder %s35, 1
        %s737 = scalar_select %p736, %s35, 1
        %s738 = smul.addr %s737, 8
        %s739 = smul.addr %s738, 4
        %s740 = scalar_lea.vmem %s10, %s739
        %p741 = pneg %p323
        %p742 = pneg %p320
        %p743 = scmp.lt.s32.totalorder %s35, 1
        %s744 = scalar_select %p743, %s35, 1
        %s745 = scalar_lea.vmem %s11, %s744
        %p746 = pneg %p349
        %p747 = pneg %p346
        %p748 = scmp.lt.s32.totalorder %s35, 1
        %s749 = scalar_select %p748, %s35, 1
        %s750 = scalar_lea.vmem %s12, %s749
        %p751 = pneg %p375
        %p752 = pneg %p372
        %s753 = sand.u32 %s30, 1
        %s754 = scalar_lea.sflag [#allocation3], %s753
        %s755 = sand.u32 %s388, 1
        %s756 = scalar_lea.vmem [#allocation9], %s755
        %p757 = pneg %p401
        %p758 = pneg %p398
        %p759 = pneg %p422
        %p760 = pneg %p419
        %p761 = pneg %p443
        %p762 = pneg %p440
        %p763 = pneg %p469
        %p764 = pneg %p466
        %s765 = smul.u32 2, %s34
        %s766 = smul.u32 2, %s34
        %p767 = scmp.lt.s32.totalorder %s35, 1
        %s768 = scalar_select %p767, %s35, 1
        %s769 = smul.addr %s768, 4
        %s770 = smul.addr %s769, 4
        %s771 = scalar_lea.vmem %s2, %s770
        %p772 = scmp.lt.s32.totalorder %s35, 1
        %s773 = scalar_select %p772, %s35, 1
        %s774 = smul.addr %s773, 4
        %s775 = smul.addr %s774, 4
        %s776 = scalar_lea.vmem %s4, %s775
        %p777 = scmp.lt.s32.totalorder %s35, 1
        %s778 = scalar_select %p777, %s35, 1
        %s779 = scalar_lea.vmem %s5, %s778
        %p780 = scmp.lt.s32.totalorder %s35, 1
        %s781 = scalar_select %p780, %s35, 1
        %s782 = scalar_lea.vmem %s6, %s781
        %p783 = scmp.lt.s32.totalorder %s35, 1
        %s784 = scalar_select %p783, %s35, 1
        %s785 = smul.addr %s784, 4
        %s786 = smul.addr %s785, 4
        %s787 = scalar_lea.vmem %s8, %s786
        %p788 = scmp.lt.s32.totalorder %s35, 1
        %s789 = scalar_select %p788, %s35, 1
        %s790 = scalar_lea.vmem %s9, %s789
        %p791 = scmp.lt.s32.totalorder %s35, 1
        %s792 = scalar_select %p791, %s35, 1
        %s793 = smul.addr %s792, 8
        %s794 = smul.addr %s793, 4
        %s795 = scalar_lea.vmem %s10, %s794
        %p796 = scmp.lt.s32.totalorder %s35, 1
        %s797 = scalar_select %p796, %s35, 1
        %s798 = scalar_lea.vmem %s11, %s797
        %p799 = scmp.lt.s32.totalorder %s35, 1
        %s800 = scalar_select %p799, %s35, 1
        %s801 = scalar_lea.vmem %s12, %s800
        %s802 = smul.u32 2, %s34
        %p804 = scmp.eq.s32.totalorder %s35, 0
        // Predicated region
        $region105: #{tpu_custom_call.1} parent=83 // pred_check
          %p805 = pneg %p804
        $region106: #{tpu_custom_call.1} parent=83 // pred_check_branch
          %807 = sbr.rel (%p805) target = $region108
        $region107: #{tpu_custom_call.1} parent=83 // pred_region
          %v808 = vld [vmem:[#allocation2] sm:$0xff]
          %v809 = vld [vmem:[#allocation2 + $0x8] sm:$0xff]
          %vm810 = vcmask 261120
          %811 = vst.msk [vmem:[#allocation10] sm:$0xff] %vm810, %v808
          %812 = vst.msk [vmem:[#allocation10 + $0x8] sm:$0xff] %vm810, %v809
        $region108: #{tpu_custom_call.1} parent=83 // pred_fallthru
          _
        %v813 = vld [vmem:[#allocation10] sm:$0xff]
        %v814 = vld [vmem:[#allocation10 + $0x8] sm:$0xff]
        %v815 = vpack.c.bf16 %v814, %v813
        %v816 = vld [vmem:[%s771] sm:$0xf]
        %v817 = vld [vmem:[%s771 + $0x4] sm:$0xf]
        %v818 = vld [vmem:[%s771 + $0x8] sm:$0xf]
        %v819 = vld [vmem:[%s771 + $0xc] sm:$0xf]
        %v820 = vld [vmem:[%s660] sm:$0x1]
        %v822 = vperm.slane %v820, 0
        %v828 = vunpack.c.l.b16 %v816
        %v829 = vunpack.c.l.b16 %v817
        %v830 = vunpack.c.l.b16 %v818
        %v831 = vunpack.c.l.b16 %v819
        %v832 = vpack.c.b16 %v829, %v828
        %v833 = vpack.c.b16 %v831, %v830
        %vm836 = vcmask 261120
        %v838 = vsel %vm836, %v815, 0
        %840 = vmatpush.bf16.msra.mxu0 0
        %841 = vmatpush.bf16.msra.mxu0 0
        %842 = vmatpush.bf16.msra.mxu0 0
        %843 = vmatpush.bf16.msra.mxu0 0
        %844 = vmatpush.bf16.msra.mxu0 0
        %845 = vmatpush.bf16.msra.mxu0 0
        %846 = vmatpush.bf16.msra.mxu0 %v833
        %847 = vmatpush.bf16.msra.mxu0 %v832
        %848 = vmatmul.bf16.gmra.mxu0 %v838
        %v849 = vpop.f32.mrf.mxu0
        %v850 = vadd.f32 %v822, %v849
        %v851 = vpop.f32.mrf.mxu0
        %v852 = vadd.f32 %v822, %v851
        %853 = vdwg.mxu0
        %v854 = vld [vmem:[#allocation5] sm:$0x1]
        %v855 = vld [vmem:[#allocation5 + $0x1] sm:$0x1]
        %v856 = vpack.c.bf16 %v850, %v850
        %v857 = vpack.c.bf16 %v852, %v852
        %v860 = vperm.slane %v854, 0
        %v861 = vperm.slane %v855, 0
        %v865 = vunpack.c.l.b16 %v856
        %v866 = vpack.c.b16 %v865, %v865
        %867 = vrot.lane.b32.xlu0 %v866, 96
        %v868 = vpop.permute.xlu0 %867
        %vm869 = vcmask 64512
        %v871 = vsel %vm869, %v856, 0
        %v874 = vsel %vm869, %v868, 0
        %876 = vmatpush.bf16.xpose.msra.mxu0 0
        %877 = vmatpush.bf16.xpose.msra.mxu0 0
        %878 = vmatpush.bf16.xpose.msra.mxu0 0
        %879 = vmatpush.bf16.xpose.msra.mxu0 0
        %880 = vmatpush.bf16.xpose.msra.mxu0 0
        %881 = vmatpush.bf16.xpose.msra.mxu0 0
        %882 = vmatpush.bf16.xpose.msra.mxu0 0
        %883 = vmatpush.bf16.xpose.msra.mxu0 %v874
        %884 = vmatmul.bf16.gmra.mxu0 %v871
        %v885 = vpop.f32.mrf.mxu0
        %v886 = vadd.f32 %v860, %v885
        %v887 = vpop.f32.mrf.mxu0
        %888 = vdwg.mxu0
        %v890 = vunpack.c.l.b16 %v857
        %v891 = vpack.c.b16 %v890, %v890
        %892 = vrot.lane.b32.xlu0 %v891, 96
        %v893 = vpop.permute.xlu0 %892
        %v895 = vsel %vm869, %v857, 0
        %v898 = vsel %vm869, %v893, 0
        %900 = vmatpush.bf16.xpose.msra.mxu0 0
        %901 = vmatpush.bf16.xpose.msra.mxu0 0
        %902 = vmatpush.bf16.xpose.msra.mxu0 0
        %903 = vmatpush.bf16.xpose.msra.mxu0 0
        %904 = vmatpush.bf16.xpose.msra.mxu0 0
        %905 = vmatpush.bf16.xpose.msra.mxu0 0
        %906 = vmatpush.bf16.xpose.msra.mxu0 0
        %907 = vmatpush.bf16.xpose.msra.mxu0 %v898
        %908 = vmatmul.bf16.gmra.mxu0 %v895
        %v909 = vpop.f32.mrf.mxu0
        %v910 = vadd.f32 %v861, %v909
        %v911 = vpop.f32.mrf.mxu0
        %912 = vdwg.mxu0
        %v913 = vsel %vm869, %v886, -inf
        %914 = vmax.xlane.f32.xlu0 %v913
        %v915 = vpop.xlane.xlu0 %914
        %v916 = vsel %vm869, %v910, -inf
        %917 = vmax.xlane.f32.xlu0 %v916
        %v918 = vpop.xlane.xlu0 %917
        %v919 = vsub.f32 %v886, %v915
        %v920 = vsub.f32 %v910, %v918
        %v921 = vmul.f32 %v919, 1.442695
        %v922 = vpow.pop %v921
        %v923 = vmul.f32 %v920, 1.442695
        %v924 = vpow.pop %v923
        %v925 = vsel %vm869, %v922, 0.0
        %926 = vadd.xlane.f32.xlu0 %v925
        %v927 = vpop.xlane.xlu0 %926
        %v928 = vsel %vm869, %v924, 0.0
        %929 = vadd.xlane.f32.xlu0 %v928
        %v930 = vpop.xlane.xlu0 %929
        %v931 = vrcp.pop %v927
        %v932 = vrcp.pop %v930
        %v933 = vmul.f32 %v922, %v931
        %v934 = vmul.f32 %v924, %v932
        %v935 = vpack.c.bf16 %v933, %v933
        %v936 = vpack.c.bf16 %v934, %v934
        %937 = vrot.lane.b32.xlu0 %v866, 64
        %v938 = vpop.permute.xlu0 %937
        %v940 = vsel %vm869, %v935, 0
        %vm942 = vcmask 1043456
        %v944 = vsel %vm942, %v938, 0
        %946 = vmatpush.bf16.msra.mxu0 0
        %947 = vmatpush.bf16.msra.mxu0 0
        %948 = vmatpush.bf16.msra.mxu0 0
        %949 = vmatpush.bf16.msra.mxu0 0
        %950 = vmatpush.bf16.msra.mxu0 0
        %951 = vmatpush.bf16.msra.mxu0 0
        %952 = vmatpush.bf16.msra.mxu0 0
        %953 = vmatpush.bf16.msra.mxu0 %v944
        %954 = vmatmul.bf16.gmra.mxu0 %v940
        %v955 = vpop.f32.mrf.mxu0
        %v956 = vadd.f32 0.0, %v955
        %v957 = vpop.f32.mrf.mxu0
        %958 = vdwg.mxu0
        %959 = vrot.lane.b32.xlu0 %v891, 64
        %v960 = vpop.permute.xlu0 %959
        %v962 = vsel %vm869, %v936, 0
        %v965 = vsel %vm942, %v960, 0
        %967 = vmatpush.bf16.msra.mxu0 0
        %968 = vmatpush.bf16.msra.mxu0 0
        %969 = vmatpush.bf16.msra.mxu0 0
        %970 = vmatpush.bf16.msra.mxu0 0
        %971 = vmatpush.bf16.msra.mxu0 0
        %972 = vmatpush.bf16.msra.mxu0 0
        %973 = vmatpush.bf16.msra.mxu0 0
        %974 = vmatpush.bf16.msra.mxu0 %v965
        %975 = vmatmul.bf16.gmra.mxu0 %v962
        %v976 = vpop.f32.mrf.mxu0
        %v977 = vadd.f32 0.0, %v976
        %v978 = vpop.f32.mrf.mxu0
        %979 = vdwg.mxu0
        %980 = vrot.lane.b32.xlu0 %v866, 120
        %v981 = vpop.permute.xlu0 %980
        %982 = vrot.lane.b32.xlu0 %v866, 88
        %v983 = vpop.permute.xlu0 %982
        %v985 = vsel %vm869, %v981, 0
        %v988 = vsel %vm869, %v983, 0
        %990 = vmatpush.bf16.xpose.msra.mxu0 0
        %991 = vmatpush.bf16.xpose.msra.mxu0 0
        %992 = vmatpush.bf16.xpose.msra.mxu0 0
        %993 = vmatpush.bf16.xpose.msra.mxu0 0
        %994 = vmatpush.bf16.xpose.msra.mxu0 0
        %995 = vmatpush.bf16.xpose.msra.mxu0 0
        %996 = vmatpush.bf16.xpose.msra.mxu0 0
        %997 = vmatpush.bf16.xpose.msra.mxu0 %v988
        %998 = vmatmul.bf16.gmra.mxu0 %v985
        %v999 = vpop.f32.mrf.mxu0
        %v1000 = vadd.f32 %v860, %v999
        %v1001 = vpop.f32.mrf.mxu0
        %1002 = vdwg.mxu0
        %1003 = vrot.lane.b32.xlu0 %v891, 120
        %v1004 = vpop.permute.xlu0 %1003
        %1005 = vrot.lane.b32.xlu0 %v891, 88
        %v1006 = vpop.permute.xlu0 %1005
        %v1008 = vsel %vm869, %v1004, 0
        %v1011 = vsel %vm869, %v1006, 0
        %1013 = vmatpush.bf16.xpose.msra.mxu0 0
        %1014 = vmatpush.bf16.xpose.msra.mxu0 0
        %1015 = vmatpush.bf16.xpose.msra.mxu0 0
        %1016 = vmatpush.bf16.xpose.msra.mxu0 0
        %1017 = vmatpush.bf16.xpose.msra.mxu0 0
        %1018 = vmatpush.bf16.xpose.msra.mxu0 0
        %1019 = vmatpush.bf16.xpose.msra.mxu0 0
        %1020 = vmatpush.bf16.xpose.msra.mxu0 %v1011
        %1021 = vmatmul.bf16.gmra.mxu0 %v1008
        %v1022 = vpop.f32.mrf.mxu0
        %v1023 = vadd.f32 %v861, %v1022
        %v1024 = vpop.f32.mrf.mxu0
        %1025 = vdwg.mxu0
        %v1026 = vsel %vm869, %v1000, -inf
        %1027 = vmax.xlane.f32.xlu0 %v1026
        %v1028 = vpop.xlane.xlu0 %1027
        %v1029 = vsel %vm869, %v1023, -inf
        %1030 = vmax.xlane.f32.xlu0 %v1029
        %v1031 = vpop.xlane.xlu0 %1030
        %v1032 = vsub.f32 %v1000, %v1028
        %v1033 = vsub.f32 %v1023, %v1031
        %v1034 = vmul.f32 %v1032, 1.442695
        %v1035 = vpow.pop %v1034
        %v1036 = vmul.f32 %v1033, 1.442695
        %v1037 = vpow.pop %v1036
        %v1038 = vsel %vm869, %v1035, 0.0
        %1039 = vadd.xlane.f32.xlu0 %v1038
        %v1040 = vpop.xlane.xlu0 %1039
        %v1041 = vsel %vm869, %v1037, 0.0
        %1042 = vadd.xlane.f32.xlu0 %v1041
        %v1043 = vpop.xlane.xlu0 %1042
        %v1044 = vrcp.pop %v1040
        %v1045 = vrcp.pop %v1043
        %v1046 = vmul.f32 %v1035, %v1044
        %v1047 = vmul.f32 %v1037, %v1045
        %v1048 = vpack.c.bf16 %v1046, %v1046
        %v1049 = vpack.c.bf16 %v1047, %v1047
        %1050 = vrot.lane.b32.xlu0 %v866, 56
        %v1051 = vpop.permute.xlu0 %1050
        %v1053 = vsel %vm869, %v1048, 0
        %v1056 = vsel %vm942, %v1051, 0
        %1058 = vmatpush.bf16.msra.mxu0 0
        %1059 = vmatpush.bf16.msra.mxu0 0
        %1060 = vmatpush.bf16.msra.mxu0 0
        %1061 = vmatpush.bf16.msra.mxu0 0
        %1062 = vmatpush.bf16.msra.mxu0 0
        %1063 = vmatpush.bf16.msra.mxu0 0
        %1064 = vmatpush.bf16.msra.mxu0 0
        %1065 = vmatpush.bf16.msra.mxu0 %v1056
        %1066 = vmatmul.bf16.gmra.mxu0 %v1053
        %v1067 = vpop.f32.mrf.mxu0
        %v1068 = vadd.f32 0.0, %v1067
        %v1069 = vpop.f32.mrf.mxu0
        %1070 = vdwg.mxu0
        %1071 = vrot.lane.b32.xlu0 %v891, 56
        %v1072 = vpop.permute.xlu0 %1071
        %v1074 = vsel %vm869, %v1049, 0
        %v1077 = vsel %vm942, %v1072, 0
        %1079 = vmatpush.bf16.msra.mxu0 0
        %1080 = vmatpush.bf16.msra.mxu0 0
        %1081 = vmatpush.bf16.msra.mxu0 0
        %1082 = vmatpush.bf16.msra.mxu0 0
        %1083 = vmatpush.bf16.msra.mxu0 0
        %1084 = vmatpush.bf16.msra.mxu0 0
        %1085 = vmatpush.bf16.msra.mxu0 0
        %1086 = vmatpush.bf16.msra.mxu0 %v1077
        %1087 = vmatmul.bf16.gmra.mxu0 %v1074
        %v1088 = vpop.f32.mrf.mxu0
        %v1089 = vadd.f32 0.0, %v1088
        %v1090 = vpop.f32.mrf.mxu0
        %1091 = vdwg.mxu0
        %1092 = vrot.lane.b32.xlu0 %v866, 112
        %v1093 = vpop.permute.xlu0 %1092
        %1094 = vrot.lane.b32.xlu0 %v866, 80
        %v1095 = vpop.permute.xlu0 %1094
        %v1097 = vsel %vm869, %v1093, 0
        %v1100 = vsel %vm869, %v1095, 0
        %1102 = vmatpush.bf16.xpose.msra.mxu0 0
        %1103 = vmatpush.bf16.xpose.msra.mxu0 0
        %1104 = vmatpush.bf16.xpose.msra.mxu0 0
        %1105 = vmatpush.bf16.xpose.msra.mxu0 0
        %1106 = vmatpush.bf16.xpose.msra.mxu0 0
        %1107 = vmatpush.bf16.xpose.msra.mxu0 0
        %1108 = vmatpush.bf16.xpose.msra.mxu0 0
        %1109 = vmatpush.bf16.xpose.msra.mxu0 %v1100
        %1110 = vmatmul.bf16.gmra.mxu0 %v1097
        %v1111 = vpop.f32.mrf.mxu0
        %v1112 = vadd.f32 %v860, %v1111
        %v1113 = vpop.f32.mrf.mxu0
        %1114 = vdwg.mxu0
        %1115 = vrot.lane.b32.xlu0 %v891, 112
        %v1116 = vpop.permute.xlu0 %1115
        %1117 = vrot.lane.b32.xlu0 %v891, 80
        %v1118 = vpop.permute.xlu0 %1117
        %v1120 = vsel %vm869, %v1116, 0
        %v1123 = vsel %vm869, %v1118, 0
        %1125 = vmatpush.bf16.xpose.msra.mxu0 0
        %1126 = vmatpush.bf16.xpose.msra.mxu0 0
        %1127 = vmatpush.bf16.xpose.msra.mxu0 0
        %1128 = vmatpush.bf16.xpose.msra.mxu0 0
        %1129 = vmatpush.bf16.xpose.msra.mxu0 0
        %1130 = vmatpush.bf16.xpose.msra.mxu0 0
        %1131 = vmatpush.bf16.xpose.msra.mxu0 0
        %1132 = vmatpush.bf16.xpose.msra.mxu0 %v1123
        %1133 = vmatmul.bf16.gmra.mxu0 %v1120
        %v1134 = vpop.f32.mrf.mxu0
        %v1135 = vadd.f32 %v861, %v1134
        %v1136 = vpop.f32.mrf.mxu0
        %1137 = vdwg.mxu0
        %v1138 = vsel %vm869, %v1112, -inf
        %1139 = vmax.xlane.f32.xlu0 %v1138
        %v1140 = vpop.xlane.xlu0 %1139
        %v1141 = vsel %vm869, %v1135, -inf
        %1142 = vmax.xlane.f32.xlu0 %v1141
        %v1143 = vpop.xlane.xlu0 %1142
        %v1144 = vsub.f32 %v1112, %v1140
        %v1145 = vsub.f32 %v1135, %v1143
        %v1146 = vmul.f32 %v1144, 1.442695
        %v1147 = vpow.pop %v1146
        %v1148 = vmul.f32 %v1145, 1.442695
        %v1149 = vpow.pop %v1148
        %v1150 = vsel %vm869, %v1147, 0.0
        %1151 = vadd.xlane.f32.xlu0 %v1150
        %v1152 = vpop.xlane.xlu0 %1151
        %v1153 = vsel %vm869, %v1149, 0.0
        %1154 = vadd.xlane.f32.xlu0 %v1153
        %v1155 = vpop.xlane.xlu0 %1154
        %v1156 = vrcp.pop %v1152
        %v1157 = vrcp.pop %v1155
        %v1158 = vmul.f32 %v1147, %v1156
        %v1159 = vmul.f32 %v1149, %v1157
        %v1160 = vpack.c.bf16 %v1158, %v1158
        %v1161 = vpack.c.bf16 %v1159, %v1159
        %1162 = vrot.lane.b32.xlu0 %v866, 48
        %v1163 = vpop.permute.xlu0 %1162
        %v1165 = vsel %vm869, %v1160, 0
        %v1168 = vsel %vm942, %v1163, 0
        %1170 = vmatpush.bf16.msra.mxu0 0
        %1171 = vmatpush.bf16.msra.mxu0 0
        %1172 = vmatpush.bf16.msra.mxu0 0
        %1173 = vmatpush.bf16.msra.mxu0 0
        %1174 = vmatpush.bf16.msra.mxu0 0
        %1175 = vmatpush.bf16.msra.mxu0 0
        %1176 = vmatpush.bf16.msra.mxu0 0
        %1177 = vmatpush.bf16.msra.mxu0 %v1168
        %1178 = vmatmul.bf16.gmra.mxu0 %v1165
        %v1179 = vpop.f32.mrf.mxu0
        %v1180 = vadd.f32 0.0, %v1179
        %v1181 = vpop.f32.mrf.mxu0
        %1182 = vdwg.mxu0
        %1183 = vrot.lane.b32.xlu0 %v891, 48
        %v1184 = vpop.permute.xlu0 %1183
        %v1186 = vsel %vm869, %v1161, 0
        %v1189 = vsel %vm942, %v1184, 0
        %1191 = vmatpush.bf16.msra.mxu0 0
        %1192 = vmatpush.bf16.msra.mxu0 0
        %1193 = vmatpush.bf16.msra.mxu0 0
        %1194 = vmatpush.bf16.msra.mxu0 0
        %1195 = vmatpush.bf16.msra.mxu0 0
        %1196 = vmatpush.bf16.msra.mxu0 0
        %1197 = vmatpush.bf16.msra.mxu0 0
        %1198 = vmatpush.bf16.msra.mxu0 %v1189
        %1199 = vmatmul.bf16.gmra.mxu0 %v1186
        %v1200 = vpop.f32.mrf.mxu0
        %v1201 = vadd.f32 0.0, %v1200
        %v1202 = vpop.f32.mrf.mxu0
        %1203 = vdwg.mxu0
        %1204 = vrot.lane.b32.xlu0 %v866, 104
        %v1205 = vpop.permute.xlu0 %1204
        %1206 = vrot.lane.b32.xlu0 %v866, 72
        %v1207 = vpop.permute.xlu0 %1206
        %v1209 = vsel %vm869, %v1205, 0
        %v1212 = vsel %vm869, %v1207, 0
        %1214 = vmatpush.bf16.xpose.msra.mxu0 0
        %1215 = vmatpush.bf16.xpose.msra.mxu0 0
        %1216 = vmatpush.bf16.xpose.msra.mxu0 0
        %1217 = vmatpush.bf16.xpose.msra.mxu0 0
        %1218 = vmatpush.bf16.xpose.msra.mxu0 0
        %1219 = vmatpush.bf16.xpose.msra.mxu0 0
        %1220 = vmatpush.bf16.xpose.msra.mxu0 0
        %1221 = vmatpush.bf16.xpose.msra.mxu0 %v1212
        %1222 = vmatmul.bf16.gmra.mxu0 %v1209
        %v1223 = vpop.f32.mrf.mxu0
        %v1224 = vadd.f32 %v860, %v1223
        %v1225 = vpop.f32.mrf.mxu0
        %1226 = vdwg.mxu0
        %1227 = vrot.lane.b32.xlu0 %v891, 104
        %v1228 = vpop.permute.xlu0 %1227
        %1229 = vrot.lane.b32.xlu0 %v891, 72
        %v1230 = vpop.permute.xlu0 %1229
        %v1232 = vsel %vm869, %v1228, 0
        %v1235 = vsel %vm869, %v1230, 0
        %1237 = vmatpush.bf16.xpose.msra.mxu0 0
        %1238 = vmatpush.bf16.xpose.msra.mxu0 0
        %1239 = vmatpush.bf16.xpose.msra.mxu0 0
        %1240 = vmatpush.bf16.xpose.msra.mxu0 0
        %1241 = vmatpush.bf16.xpose.msra.mxu0 0
        %1242 = vmatpush.bf16.xpose.msra.mxu0 0
        %1243 = vmatpush.bf16.xpose.msra.mxu0 0
        %1244 = vmatpush.bf16.xpose.msra.mxu0 %v1235
        %1245 = vmatmul.bf16.gmra.mxu0 %v1232
        %v1246 = vpop.f32.mrf.mxu0
        %v1247 = vadd.f32 %v861, %v1246
        %v1248 = vpop.f32.mrf.mxu0
        %1249 = vdwg.mxu0
        %v1250 = vsel %vm869, %v1224, -inf
        %1251 = vmax.xlane.f32.xlu0 %v1250
        %v1252 = vpop.xlane.xlu0 %1251
        %v1253 = vsel %vm869, %v1247, -inf
        %1254 = vmax.xlane.f32.xlu0 %v1253
        %v1255 = vpop.xlane.xlu0 %1254
        %v1256 = vsub.f32 %v1224, %v1252
        %v1257 = vsub.f32 %v1247, %v1255
        %v1258 = vmul.f32 %v1256, 1.442695
        %v1259 = vpow.pop %v1258
        %v1260 = vmul.f32 %v1257, 1.442695
        %v1261 = vpow.pop %v1260
        %v1262 = vsel %vm869, %v1259, 0.0
        %1263 = vadd.xlane.f32.xlu0 %v1262
        %v1264 = vpop.xlane.xlu0 %1263
        %v1265 = vsel %vm869, %v1261, 0.0
        %1266 = vadd.xlane.f32.xlu0 %v1265
        %v1267 = vpop.xlane.xlu0 %1266
        %v1268 = vrcp.pop %v1264
        %v1269 = vrcp.pop %v1267
        %v1270 = vmul.f32 %v1259, %v1268
        %v1271 = vmul.f32 %v1261, %v1269
        %v1272 = vpack.c.bf16 %v1270, %v1270
        %v1273 = vpack.c.bf16 %v1271, %v1271
        %1274 = vrot.lane.b32.xlu0 %v866, 40
        %v1275 = vpop.permute.xlu0 %1274
        %v1277 = vsel %vm869, %v1272, 0
        %v1280 = vsel %vm942, %v1275, 0
        %1282 = vmatpush.bf16.msra.mxu0 0
        %1283 = vmatpush.bf16.msra.mxu0 0
        %1284 = vmatpush.bf16.msra.mxu0 0
        %1285 = vmatpush.bf16.msra.mxu0 0
        %1286 = vmatpush.bf16.msra.mxu0 0
        %1287 = vmatpush.bf16.msra.mxu0 0
        %1288 = vmatpush.bf16.msra.mxu0 0
        %1289 = vmatpush.bf16.msra.mxu0 %v1280
        %1290 = vmatmul.bf16.gmra.mxu0 %v1277
        %v1291 = vpop.f32.mrf.mxu0
        %v1292 = vadd.f32 0.0, %v1291
        %v1293 = vpop.f32.mrf.mxu0
        %1294 = vdwg.mxu0
        %1295 = vrot.lane.b32.xlu0 %v891, 40
        %v1296 = vpop.permute.xlu0 %1295
        %v1298 = vsel %vm869, %v1273, 0
        %v1301 = vsel %vm942, %v1296, 0
        %1303 = vmatpush.bf16.msra.mxu0 0
        %1304 = vmatpush.bf16.msra.mxu0 0
        %1305 = vmatpush.bf16.msra.mxu0 0
        %1306 = vmatpush.bf16.msra.mxu0 0
        %1307 = vmatpush.bf16.msra.mxu0 0
        %1308 = vmatpush.bf16.msra.mxu0 0
        %1309 = vmatpush.bf16.msra.mxu0 0
        %1310 = vmatpush.bf16.msra.mxu0 %v1301
        %1311 = vmatmul.bf16.gmra.mxu0 %v1298
        %v1312 = vpop.f32.mrf.mxu0
        %v1313 = vadd.f32 0.0, %v1312
        %v1314 = vpop.f32.mrf.mxu0
        %1315 = vdwg.mxu0
        %1318 = vrot.lane.b32.xlu0 %v1068, 8
        %v1319 = vpop.permute.xlu0 %1318
        %1320 = vrot.lane.b32.xlu0 %v1089, 8
        %v1321 = vpop.permute.xlu0 %1320
        %1326 = vrot.lane.b32.xlu0 %v1180, 16
        %v1327 = vpop.permute.xlu0 %1326
        %1328 = vrot.lane.b32.xlu0 %v1201, 16
        %v1329 = vpop.permute.xlu0 %1328
        %1334 = vrot.lane.b32.xlu0 %v1292, 24
        %v1335 = vpop.permute.xlu0 %1334
        %1336 = vrot.lane.b32.xlu0 %v1313, 24
        %v1337 = vpop.permute.xlu0 %1336
        %v1340 = vsel %vm869, %v956, %v1319
        %v1341 = vsel %vm869, %v977, %v1321
        %vm1342 = vcmask 130048
        %v1343 = vsel %vm1342, %v1340, %v1327
        %v1344 = vsel %vm1342, %v1341, %v1329
        %vm1345 = vcmask 195584
        %v1346 = vsel %vm1345, %v1343, %v1335
        %v1347 = vsel %vm1345, %v1344, %v1337
        %v1348 = vpack.c.bf16 %v1347, %v1346
        %v1349 = vld [vmem:[%s776] sm:$0xf]
        %v1350 = vld [vmem:[%s776 + $0x4] sm:$0xf]
        %v1351 = vld [vmem:[%s776 + $0x8] sm:$0xf]
        %v1352 = vld [vmem:[%s776 + $0xc] sm:$0xf]
        %v1353 = vld [vmem:[%s779] sm:$0x1]
        %v1355 = vperm.slane %v1353, 0
        %v1361 = vunpack.c.l.b16 %v1349
        %v1362 = vunpack.c.l.b16 %v1350
        %v1363 = vunpack.c.l.b16 %v1351
        %v1364 = vunpack.c.l.b16 %v1352
        %v1365 = vpack.c.b16 %v1362, %v1361
        %v1366 = vpack.c.b16 %v1364, %v1363
        %v1370 = vsel %vm836, %v1348, 0
        %1372 = vmatpush.bf16.msra.mxu0 0
        %1373 = vmatpush.bf16.msra.mxu0 0
        %1374 = vmatpush.bf16.msra.mxu0 0
        %1375 = vmatpush.bf16.msra.mxu0 0
        %1376 = vmatpush.bf16.msra.mxu0 0
        %1377 = vmatpush.bf16.msra.mxu0 0
        %1378 = vmatpush.bf16.msra.mxu0 %v1366
        %1379 = vmatpush.bf16.msra.mxu0 %v1365
        %1380 = vmatmul.bf16.gmra.mxu0 %v1370
        %v1381 = vpop.f32.mrf.mxu0
        %v1382 = vadd.f32 %v1355, %v1381
        %v1383 = vpop.f32.mrf.mxu0
        %v1384 = vadd.f32 %v1355, %v1383
        %1385 = vdwg.mxu0
        %v1386 = vadd.f32 %v813, %v1382
        %v1387 = vadd.f32 %v814, %v1384
        %v1388 = vld [vmem:[%s782] sm:$0x1]
        %v1389 = vld [vmem:[%s669] sm:$0x1]
        %v1390 = vsel %vm836, %v1386, 0.0
        %1391 = vadd.xlane.f32.xlu0 %v1390
        %v1392 = vpop.xlane.xlu0 %1391
        %v1393 = vsel %vm836, %v1387, 0.0
        %1394 = vadd.xlane.f32.xlu0 %v1393
        %v1395 = vpop.xlane.xlu0 %1394
        %v1396 = vrcp.pop 32.0
        %v1397 = vmul.f32 32.0, %v1396
        %v1398 = vsub.f32 1.0, %v1397
        %v1399 = vmul.f32 %v1396, %v1398
        %v1400 = vadd.f32 %v1396, %v1399
        %vm1401 = vweird.f32 %v1396
        %v1402 = vsel %vm1401, %v1396, %v1400
        %v1403 = vmul.f32 %v1392, %v1402
        %v1404 = vmul.f32 %v1395, %v1402
        %v1405 = vsub.f32 %v1386, %v1403
        %v1406 = vsub.f32 %v1387, %v1404
        %v1407 = vmul.f32 %v1405, %v1405
        %v1408 = vmul.f32 %v1406, %v1406
        %v1409 = vsel %vm836, %v1407, 0.0
        %1410 = vadd.xlane.f32.xlu0 %v1409
        %v1411 = vpop.xlane.xlu0 %1410
        %v1412 = vsel %vm836, %v1408, 0.0
        %1413 = vadd.xlane.f32.xlu0 %v1412
        %v1414 = vpop.xlane.xlu0 %1413
        %v1415 = vmul.f32 %v1411, %v1402
        %v1416 = vmul.f32 %v1414, %v1402
        %v1417 = vadd.f32 %v1415, 1e-05
        %v1418 = vadd.f32 %v1416, 1e-05
        %v1419 = vrsqrt.pop %v1417
        %v1420 = vmul.f32 %v1419, %v1417
        %v1421 = vmul.f32 %v1420, %v1419
        %v1422 = vmul.f32 0.5, %v1421
        %v1423 = vsub.f32 1.5, %v1422
        %v1424 = vmul.f32 %v1419, %v1423
        %vm1425 = vweird.f32 %v1417
        %vm1426 = vweird.f32 %v1419
        %vm1427 = vmor %vm1425, %vm1426
        %v1428 = vsel %vm1427, %v1419, %v1424
        %v1429 = vrsqrt.pop %v1418
        %v1430 = vmul.f32 %v1429, %v1418
        %v1431 = vmul.f32 %v1430, %v1429
        %v1432 = vmul.f32 0.5, %v1431
        %v1433 = vsub.f32 1.5, %v1432
        %v1434 = vmul.f32 %v1429, %v1433
        %vm1435 = vweird.f32 %v1418
        %vm1436 = vweird.f32 %v1429
        %vm1437 = vmor %vm1435, %vm1436
        %v1438 = vsel %vm1437, %v1429, %v1434
        %v1439 = vmul.f32 %v1405, %v1428
        %v1440 = vmul.f32 %v1406, %v1438
        %v1442 = vperm.slane %v1388, 0
        %v1444 = vmul.f32 %v1439, %v1442
        %v1445 = vmul.f32 %v1440, %v1442
        %v1447 = vperm.slane %v1389, 0
        %v1449 = vadd.f32 %v1444, %v1447
        %v1450 = vadd.f32 %v1445, %v1447
        %v1451 = vpack.c.bf16 %v1450, %v1449
        %v1452 = vld [vmem:[%s787] sm:$0xf]
        %v1453 = vld [vmem:[%s787 + $0x4] sm:$0xf]
        %v1454 = vld [vmem:[%s787 + $0x8] sm:$0xf]
        %v1455 = vld [vmem:[%s787 + $0xc] sm:$0xf]
        %v1456 = vld [vmem:[%s790] sm:$0x1]
        %v1458 = vperm.slane %v1456, 0
        %v1464 = vunpack.c.l.b16 %v1452
        %v1465 = vunpack.c.l.b16 %v1453
        %v1466 = vunpack.c.l.b16 %v1454
        %v1467 = vunpack.c.l.b16 %v1455
        %v1468 = vpack.c.b16 %v1465, %v1464
        %v1469 = vpack.c.b16 %v1467, %v1466
        %v1473 = vsel %vm836, %v1451, 0
        %1475 = vmatpush.bf16.msra.mxu0 0
        %1476 = vmatpush.bf16.msra.mxu0 0
        %1477 = vmatpush.bf16.msra.mxu0 0
        %1478 = vmatpush.bf16.msra.mxu0 0
        %1479 = vmatpush.bf16.msra.mxu0 0
        %1480 = vmatpush.bf16.msra.mxu0 0
        %1481 = vmatpush.bf16.msra.mxu0 %v1469
        %1482 = vmatpush.bf16.msra.mxu0 %v1468
        %1483 = vmatmul.bf16.gmra.mxu0 %v1473
        %v1484 = vpop.f32.mrf.mxu0
        %v1485 = vadd.f32 %v1458, %v1484
        %v1486 = vpop.f32.mrf.mxu0
        %v1487 = vadd.f32 %v1458, %v1486
        %1488 = vdwg.mxu0
        %v1489 = vmax.f32 %v1485, 0.0
        %v1490 = vmax.f32 %v1487, 0.0
        %v1491 = vpack.c.bf16 %v1490, %v1489
        %v1492 = vld [vmem:[%s795] sm:$0xf]
        %v1493 = vld [vmem:[%s795 + $0x4] sm:$0xf]
        %v1494 = vld [vmem:[%s795 + $0x8] sm:$0xf]
        %v1495 = vld [vmem:[%s795 + $0xc] sm:$0xf]
        %v1496 = vld [vmem:[%s795 + $0x10] sm:$0xf]
        %v1497 = vld [vmem:[%s795 + $0x14] sm:$0xf]
        %v1498 = vld [vmem:[%s795 + $0x18] sm:$0xf]
        %v1499 = vld [vmem:[%s795 + $0x1c] sm:$0xf]
        %v1500 = vld [vmem:[%s798] sm:$0x1]
        %v1502 = vperm.slane %v1500, 0
        %v1512 = vunpack.c.l.b16 %v1492
        %v1513 = vunpack.c.l.b16 %v1493
        %v1514 = vunpack.c.l.b16 %v1494
        %v1515 = vunpack.c.l.b16 %v1495
        %v1516 = vunpack.c.l.b16 %v1496
        %v1517 = vunpack.c.l.b16 %v1497
        %v1518 = vunpack.c.l.b16 %v1498
        %v1519 = vunpack.c.l.b16 %v1499
        %v1520 = vpack.c.b16 %v1513, %v1512
        %v1521 = vpack.c.b16 %v1515, %v1514
        %v1522 = vpack.c.b16 %v1517, %v1516
        %v1523 = vpack.c.b16 %v1519, %v1518
        %vm1528 = vcmask 523264
        %v1530 = vsel %vm1528, %v1491, 0
        %1532 = vmatpush.bf16.msra.mxu0 0
        %1533 = vmatpush.bf16.msra.mxu0 0
        %1534 = vmatpush.bf16.msra.mxu0 0
        %1535 = vmatpush.bf16.msra.mxu0 0
        %1536 = vmatpush.bf16.msra.mxu0 %v1523
        %1537 = vmatpush.bf16.msra.mxu0 %v1522
        %1538 = vmatpush.bf16.msra.mxu0 %v1521
        %1539 = vmatpush.bf16.msra.mxu0 %v1520
        %1540 = vmatmul.bf16.gmra.mxu0 %v1530
        %v1541 = vpop.f32.mrf.mxu0
        %v1542 = vadd.f32 %v1502, %v1541
        %v1543 = vpop.f32.mrf.mxu0
        %v1544 = vadd.f32 %v1502, %v1543
        %1545 = vdwg.mxu0
        %v1546 = vadd.f32 %v1449, %v1542
        %v1547 = vadd.f32 %v1450, %v1544
        %v1548 = vld [vmem:[%s801] sm:$0x1]
        %v1549 = vld [vmem:[%s678] sm:$0x1]
        %v1550 = vsel %vm836, %v1546, 0.0
        %1551 = vadd.xlane.f32.xlu0 %v1550
        %v1552 = vpop.xlane.xlu0 %1551
        %v1553 = vsel %vm836, %v1547, 0.0
        %1554 = vadd.xlane.f32.xlu0 %v1553
        %v1555 = vpop.xlane.xlu0 %1554
        %v1556 = vmul.f32 %v1552, %v1402
        %v1557 = vmul.f32 %v1555, %v1402
        %v1558 = vsub.f32 %v1546, %v1556
        %v1559 = vsub.f32 %v1547, %v1557
        %v1560 = vmul.f32 %v1558, %v1558
        %v1561 = vmul.f32 %v1559, %v1559
        %v1562 = vsel %vm836, %v1560, 0.0
        %1563 = vadd.xlane.f32.xlu0 %v1562
        %v1564 = vpop.xlane.xlu0 %1563
        %v1565 = vsel %vm836, %v1561, 0.0
        %1566 = vadd.xlane.f32.xlu0 %v1565
        %v1567 = vpop.xlane.xlu0 %1566
        %v1568 = vmul.f32 %v1564, %v1402
        %v1569 = vmul.f32 %v1567, %v1402
        %v1570 = vadd.f32 %v1568, 1e-05
        %v1571 = vadd.f32 %v1569, 1e-05
        %v1572 = vrsqrt.pop %v1570
        %v1573 = vmul.f32 %v1572, %v1570
        %v1574 = vmul.f32 %v1573, %v1572
        %v1575 = vmul.f32 0.5, %v1574
        %v1576 = vsub.f32 1.5, %v1575
        %v1577 = vmul.f32 %v1572, %v1576
        %vm1578 = vweird.f32 %v1570
        %vm1579 = vweird.f32 %v1572
        %vm1580 = vmor %vm1578, %vm1579
        %v1581 = vsel %vm1580, %v1572, %v1577
        %v1582 = vrsqrt.pop %v1571
        %v1583 = vmul.f32 %v1582, %v1571
        %v1584 = vmul.f32 %v1583, %v1582
        %v1585 = vmul.f32 0.5, %v1584
        %v1586 = vsub.f32 1.5, %v1585
        %v1587 = vmul.f32 %v1582, %v1586
        %vm1588 = vweird.f32 %v1571
        %vm1589 = vweird.f32 %v1582
        %vm1590 = vmor %vm1588, %vm1589
        %v1591 = vsel %vm1590, %v1582, %v1587
        %v1592 = vmul.f32 %v1558, %v1581
        %v1593 = vmul.f32 %v1559, %v1591
        %v1595 = vperm.slane %v1548, 0
        %v1597 = vmul.f32 %v1592, %v1595
        %v1598 = vmul.f32 %v1593, %v1595
        %v1600 = vperm.slane %v1549, 0
        %v1602 = vadd.f32 %v1597, %v1600
        %v1603 = vadd.f32 %v1598, %v1600
        %p1604 = scmp.ne.s32.totalorder %s35, 1
        // Predicated region
        $region109: #{tpu_custom_call.1} parent=83 // pred_check
          %p1605 = pneg %p1604
        $region110: #{tpu_custom_call.1} parent=83 // pred_check_branch
          %1607 = sbr.rel (%p1605) target = $region112
        $region111: #{tpu_custom_call.1} parent=83 // pred_region
          %1608 = vst.msk [vmem:[#allocation10] sm:$0xff] %vm836, %v1602
          %1609 = vst.msk [vmem:[#allocation10 + $0x8] sm:$0xff] %vm836, %v1603
        $region112: #{tpu_custom_call.1} parent=83 // pred_fallthru
          _
        %p1610 = scmp.eq.s32.totalorder %s35, 1
        // Predicated region
        $region113: #{tpu_custom_call.1} parent=83 // pred_check
          %p1611 = pneg %p1610
        $region114: #{tpu_custom_call.1} parent=83 // pred_check_branch
          %1613 = sbr.rel (%p1611) target = $region116
        $region115: #{tpu_custom_call.1} parent=83 // pred_region
          %v1614 = vld [vmem:[%s14] sm:$0x1]
          %v1615 = vld [vmem:[%s15] sm:$0x1]
          %v1616 = vsel %vm836, %v1602, 0.0
          %1617 = vadd.xlane.f32.xlu0 %v1616
          %v1618 = vpop.xlane.xlu0 %1617
          %v1619 = vsel %vm836, %v1603, 0.0
          %1620 = vadd.xlane.f32.xlu0 %v1619
          %v1621 = vpop.xlane.xlu0 %1620
          %v1622 = vmul.f32 %v1618, %v1402
          %v1623 = vmul.f32 %v1621, %v1402
          %v1624 = vsub.f32 %v1602, %v1622
          %v1625 = vsub.f32 %v1603, %v1623
          %v1626 = vmul.f32 %v1624, %v1624
          %v1627 = vmul.f32 %v1625, %v1625
          %v1628 = vsel %vm836, %v1626, 0.0
          %1629 = vadd.xlane.f32.xlu0 %v1628
          %v1630 = vpop.xlane.xlu0 %1629
          %v1631 = vsel %vm836, %v1627, 0.0
          %1632 = vadd.xlane.f32.xlu0 %v1631
          %v1633 = vpop.xlane.xlu0 %1632
          %v1634 = vmul.f32 %v1630, %v1402
          %v1635 = vmul.f32 %v1633, %v1402
          %v1636 = vadd.f32 %v1634, 1e-05
          %v1637 = vadd.f32 %v1635, 1e-05
          %v1638 = vrsqrt.pop %v1636
          %v1639 = vmul.f32 %v1638, %v1636
          %v1640 = vmul.f32 %v1639, %v1638
          %v1641 = vmul.f32 0.5, %v1640
          %v1642 = vsub.f32 1.5, %v1641
          %v1643 = vmul.f32 %v1638, %v1642
          %vm1644 = vweird.f32 %v1636
          %vm1645 = vweird.f32 %v1638
          %vm1646 = vmor %vm1644, %vm1645
          %v1647 = vsel %vm1646, %v1638, %v1643
          %v1648 = vrsqrt.pop %v1637
          %v1649 = vmul.f32 %v1648, %v1637
          %v1650 = vmul.f32 %v1649, %v1648
          %v1651 = vmul.f32 0.5, %v1650
          %v1652 = vsub.f32 1.5, %v1651
          %v1653 = vmul.f32 %v1648, %v1652
          %vm1654 = vweird.f32 %v1637
          %vm1655 = vweird.f32 %v1648
          %vm1656 = vmor %vm1654, %vm1655
          %v1657 = vsel %vm1656, %v1648, %v1653
          %v1658 = vmul.f32 %v1624, %v1647
          %v1659 = vmul.f32 %v1625, %v1657
          %v1661 = vperm.slane %v1614, 0
          %v1663 = vmul.f32 %v1658, %v1661
          %v1664 = vmul.f32 %v1659, %v1661
          %v1666 = vperm.slane %v1615, 0
          %v1668 = vadd.f32 %v1663, %v1666
          %v1669 = vadd.f32 %v1664, %v1666
          %1670 = vst.msk [vmem:[#allocation10] sm:$0xff] %vm836, %v1668
          %1671 = vst.msk [vmem:[#allocation10 + $0x8] sm:$0xff] %vm836, %v1669
        $region116: #{tpu_custom_call.1} parent=83 // pred_fallthru
          _
        // Predicated region
        $region117: #{tpu_custom_call.1} parent=83 // pred_check
          %p1672 = pneg %p466
        $region118: #{tpu_custom_call.1} parent=83 // pred_check_branch
          %1674 = sbr.rel (%p1672) target = $region120
        $region119: #{tpu_custom_call.1} parent=83 // pred_region
          %s1675 = smul.u32 2, %s34
          %1677 = vsyncadd [#allocation4], 0
          %s1678 = smul.addr %s1675, 8
          %s1679 = scalar_lea.hbm %s16, %s1678
          %s1680 = sshll.u32 [#allocation10], 4
          %s1681 = int_to_ptr.vmem [resolvable:$true] %s1680
          %s1682 = sshll.u32 %s1679, 4
          %s1683 = int_to_ptr.hbm [resolvable:$true] %s1682
          %1688 = dma.vmem_to_hbm [thread:$0]  %s1681, 256, %s1683, [#allocation4], 128, 128, 8
        $region120: #{tpu_custom_call.1} parent=83 // pred_fallthru
          _
        // Predicated region
        $region121: #{tpu_custom_call.1} parent=83 // pred_check
          %p1689 = pneg %p466
        $region122: #{tpu_custom_call.1} parent=83 // pred_check_branch
          %1691 = sbr.rel (%p1689) target = $region124
        $region123: #{tpu_custom_call.1} parent=83 // pred_region
          %1693 = dma.done [#allocation4], 256
        $region124: #{tpu_custom_call.1} parent=83 // pred_fallthru
          _
      $region84: #{tpu_custom_call.1} parent=5 // pred_fallthru
        _
      %p1694 = scmp.le.s32.totalorder 2, %s25
      // Predicated region
      $region125: #{tpu_custom_call.1} parent=5 // pred_check
        %p1695 = pneg %p1694
      $region126: #{tpu_custom_call.1} parent=5 // pred_check_branch
        %1697 = sbr.rel (%p1695) target = $region128
      $region127: #{tpu_custom_call.1} parent=5 // pred_region
        %s1698 = ssub.s32 %s25, 2
      $region128: #{tpu_custom_call.1} parent=5 // pred_fallthru
        _
    $region6: #{tpu_custom_call.1} parent=1 // loop_footer
      %s29 = sadd.s32 1, %s25
    $region7: #{tpu_custom_call.1} parent=1 // loop_footer_branch
      %24 = sbr.rel target = $region3
    $region8: #{tpu_custom_call.1} parent=1 // loop_exit
      _
    %1699 = vsyncpa [#allocation3], 1
    %s1700 = scalar_lea.sflag [#allocation3], 1
    %1701 = vsyncpa %s1700, 1
    %1702 = vsyncpa [#allocation6], 1
    %1703 = vsyncpa [#allocation4], 1
    %s1704 = scalar_lea.sflag [#allocation4], 1
    %1705 = vsyncpa %s1704, 1

</llo_original>
